<compile_context>
chip_gen: v7x
topology: tpu7x:2x2x1
jax: 0.10.0
libtpu: 0.0.40
codegen_flags: <defaults>
</compile_context>

<pallas_src>
import numpy as np
import jax
import jax.numpy as jnp
from jax.experimental import pallas as pl
from jax.experimental.pallas import tpu as pltpu

CLAMP = 2.0        # GLOWCouplingBlock clamp
PERM_CHUNK = 256   # lane-column tile width for the chunked permutation matmul

# ----- small-shape stand-ins for (feat_length=2048, hidden=1024, depth=20) -----
BATCH = 8
FEAT = 256          # feat_length
HIDDEN = 256        # subnet hidden width (1024 in the original module)
DEPTH = 4           # number of (permute, coupling) blocks (20 in the original)
L1 = FEAT // 2      # split_len1
L2 = FEAT - L1      # split_len2


def _fused_inn_kernel(x_ref, perm_ref,
                      w2a_ref, s2a_ref, b2a_ref,
                      w2b_ref, s2b_ref, b2b_ref,
                      w1a_ref, s1a_ref, b1a_ref,
                      w1b_ref, s1b_ref, b1b_ref,
                      z_ref, jac_ref, xp_ref):
    """One grid step == one (PermuteRandom -> GLOWCouplingBlock) block for one batch tile."""
    d = pl.program_id(1)                     # depth index (inner, "arbitrary")
    feat = z_ref.shape[1]
    l1 = feat // 2
    l2 = feat - l1

    @pl.when(d == 0)
    def _():
        z_ref[...] = x_ref[...]
        jac_ref[...] = jnp.zeros_like(jac_ref)

    # ---- PermuteRandom(seed=d): xp[:, i] = x[:, perm[i]] ------------------------
    # Chunked bf16 one-hot matmuls (f32 accumulation) into a VMEM scratch; the
    # chunk loop is a *static* Python loop (feat is static), so every slice start
    # is static/aligned and per-chunk temps are only (feat, chunk).
    x_bf = z_ref[...].astype(jnp.bfloat16)    # (BT, feat), VMEM-resident activation
    perm = perm_ref[0]                        # (1, feat) int32
    chunk = PERM_CHUNK if feat % PERM_CHUNK == 0 else feat
    for c0 in range(0, feat, chunk):
        rows = jax.lax.broadcasted_iota(jnp.int32, (feat, chunk), 0)
        onehot = (rows == perm[:, c0:c0 + chunk]).astype(jnp.bfloat16)  # exact 0/1
        xp_ref[:, c0:c0 + chunk] = jnp.dot(x_bf, onehot,
                                           preferred_element_type=jnp.float32)

    x1 = xp_ref[:, :l1]                       # (BT, l1) f32
    x2 = xp_ref[:, l1:]                       # (BT, l2) f32

    # ---- subnet s2: l2 -> H -> 2*l1, applied to x2 (int8 weights -> exact bf16,
    # bf16 MXU inputs, f32 acc, per-output-channel scale applied post-matmul) -----
    w2a = w2a_ref[0].astype(jnp.float32).astype(jnp.bfloat16)
    h2 = jnp.dot(x2.astype(jnp.bfloat16), w2a,
                 preferred_element_type=jnp.float32) * s2a_ref[0] + b2a_ref[0]
    h2 = jnp.maximum(h2, 0.0)
    w2b = w2b_ref[0].astype(jnp.float32).astype(jnp.bfloat16)
    r2 = jnp.dot(h2.astype(jnp.bfloat16), w2b,
                 preferred_element_type=jnp.float32) * s2b_ref[0] + b2b_ref[0]
    # atan2(s, CLAMP) == atan(s / CLAMP) for CLAMP > 0; atan2 kept for robust
    # Mosaic lowering (cost is negligible in this HBM-bound regime).
    log_e2 = (CLAMP * 0.636) * jnp.arctan2(r2[:, :l1], jnp.float32(CLAMP))
    y1 = jnp.exp(log_e2) * x1 + r2[:, l1:]

    # ---- subnet s1: l1 -> H -> 2*l2, applied to y1 ------------------------------
    w1a = w1a_ref[0].astype(jnp.float32).astype(jnp.bfloat16)
    h1 = jnp.dot(y1.astype(jnp.bfloat16), w1a,
                 preferred_element_type=jnp.float32) * s1a_ref[0] + b1a_ref[0]
    h1 = jnp.maximum(h1, 0.0)
    w1b = w1b_ref[0].astype(jnp.float32).astype(jnp.bfloat16)
    r1 = jnp.dot(h1.astype(jnp.bfloat16), w1b,
                 preferred_element_type=jnp.float32) * s1b_ref[0] + b1b_ref[0]
    log_e1 = (CLAMP * 0.636) * jnp.arctan2(r1[:, :l2], jnp.float32(CLAMP))
    y2 = jnp.exp(log_e1) * x2 + r1[:, l2:]

    # Write the two halves directly (lane-aligned stores, no concatenate temp).
    z_ref[:, :l1] = y1
    z_ref[:, l1:] = y2
    jac_ref[...] += (jnp.sum(log_e1, axis=1, keepdims=True)
                     + jnp.sum(log_e2, axis=1, keepdims=True))


def _vmem_limit_bytes(batch_tile, feat, hidden, perm_chunk):
    """Scoped-VMEM budget for the int8/chunked layout; capped for v7x (64 MiB parts)."""
    l1 = feat // 2
    l2 = feat - l1
    w_int8 = l2 * hidden + hidden * 2 * l1 + l1 * hidden + hidden * 2 * l2   # 1 B each
    sb = 4 * 2 * (hidden + 2 * l1 + hidden + 2 * l2)                         # scales + biases (f32)
    per_step = 2 * (w_int8 + sb + 4 * feat)                                  # double-buffered inputs
    resident = 4 * (3 * batch_tile * feat + batch_tile)                      # x block + z + xp scratch + jac
    temps = ((4 + 2) * feat * perm_chunk                                     # chunk iota (i32) + one-hot (bf16)
             + (4 + 2) * hidden * max(2 * l1, 2 * l2)                        # f32 + bf16 weight cast copies
             + 4 * 6 * batch_tile * max(feat, 2 * hidden))                   # live activation values
    need = per_step + resident + temps + (8 << 20)
    return int(min(max(need, 32 << 20), 56 << 20))   # <= 56 MiB: fits v7x physical VMEM


@jax.jit
def basic_module_forward(x, params, perms):
    """Equivalent of BasicModule.forward(x, reverse=False) -> (z, log_jacobian)."""
    batch, feat = x.shape
    depth = perms.shape[0]
    hidden = params["b2a"].shape[-1]
    l1 = feat // 2
    l2 = feat - l1

    bt = batch if batch <= 256 else 256        # batch tile (grows effective batch per weight fetch)
    assert batch % bt == 0, "batch must be divisible by the batch tile"
    nbt = batch // bt

    wspec = lambda shape: pl.BlockSpec(shape, lambda b, d: (d, 0, 0))

    z, jac = pl.pallas_call(
        _fused_inn_kernel,
        out_shape=(jax.ShapeDtypeStruct((batch, feat), jnp.float32),
                   jax.ShapeDtypeStruct((batch, 1), jnp.float32)),
        grid_spec=pltpu.PrefetchScalarGridSpec(
            num_scalar_prefetch=0,
            grid=(nbt, depth),
            in_specs=[
                pl.BlockSpec((bt, feat), lambda b, d: (b, 0)),   # x (fetched once per batch tile)
                wspec((1, 1, feat)),                             # perm indices (int32)
                wspec((1, l2, hidden)),                          # w2a (int8)
                wspec((1, 1, hidden)),                           # s2a (f32 per-out-channel scale)
                wspec((1, 1, hidden)),                           # b2a
                wspec((1, hidden, 2 * l1)),                      # w2b (int8)
                wspec((1, 1, 2 * l1)),                           # s2b
                wspec((1, 1, 2 * l1)),                           # b2b
                wspec((1, l1, hidden)),                          # w1a (int8)
                wspec((1, 1, hidden)),                           # s1a
                wspec((1, 1, hidden)),                           # b1a
                wspec((1, hidden, 2 * l2)),                      # w1b (int8)
                wspec((1, 1, 2 * l2)),                           # s1b
                wspec((1, 1, 2 * l2)),                           # b1b
            ],
            out_specs=(
                pl.BlockSpec((bt, feat), lambda b, d: (b, 0)),   # z: resident across depth
                pl.BlockSpec((bt, 1), lambda b, d: (b, 0)),      # jac: resident accumulator
            ),
            scratch_shapes=[pltpu.VMEM((bt, feat), jnp.float32)],  # xp (permuted activation)
        ),
        compiler_params=pltpu.CompilerParams(
            dimension_semantics=("parallel", "arbitrary"),       # batch tiles ∥, depth sequential
            vmem_limit_bytes=_vmem_limit_bytes(bt, feat, hidden, min(PERM_CHUNK, feat)),
        ),
    )(x, perms,
      params["w2a"], params["s2a"], params["b2a"],
      params["w2b"], params["s2b"], params["b2b"],
      params["w1a"], params["s1a"], params["b1a"],
      params["w1b"], params["s1b"], params["b1b"])
    return z, jac[:, 0]


def init_params(key, depth=DEPTH):
    """Every trainable tensor ~ 0.01 * N(0,1) (as in BasicModule.__init__).

    Weights stacked over depth and quantized to int8 with per-output-channel f32
    scales (halves HBM weight streaming vs bf16); biases kept f32.
    """
    ks = jax.random.split(key, 8)

    def init(k, shape):
        return 0.01 * jax.random.normal(k, shape, jnp.float32)

    def quant(w):  # (depth, in, out) f32 -> (int8 weights, (depth, 1, out) f32 scales)
        amax = jnp.max(jnp.abs(w), axis=1, keepdims=True)
        scale = jnp.maximum(amax, 1e-30) / 127.0
        q = jnp.clip(jnp.round(w / scale), -127.0, 127.0).astype(jnp.int8)
        return q, scale.astype(jnp.float32)

    w2a, s2a = quant(init(ks[0], (depth, L2, HIDDEN)))
    w2b, s2b = quant(init(ks[2], (depth, HIDDEN, 2 * L1)))
    w1a, s1a = quant(init(ks[4], (depth, L1, HIDDEN)))
    w1b, s1b = quant(init(ks[6], (depth, HIDDEN, 2 * L2)))

    return {
        "w2a": w2a, "s2a": s2a, "b2a": init(ks[1], (depth, 1, HIDDEN)),
        "w2b": w2b, "s2b": s2b, "b2b": init(ks[3], (depth, 1, 2 * L1)),
        "w1a": w1a, "s1a": s1a, "b1a": init(ks[5], (depth, 1, HIDDEN)),
        "w1b": w1b, "s1b": s1b, "b1b": init(ks[7], (depth, 1, 2 * L2)),
    }


def make_permutations(depth=DEPTH, channels=FEAT):
    """fm.PermuteRandom(seed=k): fixed numpy permutation per block (log-det = 0)."""
    perms = np.stack([np.random.RandomState(k).permutation(channels)
                      for k in range(depth)]).astype(np.int32)
    return jnp.asarray(perms.reshape(depth, 1, channels))


def reference_forward(x, params, perms):
    """Pure-JAX f32 reference of the same forward math (validation only)."""
    depth = perms.shape[0]
    feat = x.shape[1]
    l1 = feat // 2
    l2 = feat - l1
    jac = jnp.zeros((x.shape[0],), jnp.float32)
    for k in range(depth):
        xk = x[:, perms[k, 0]]
        x1, x2 = xk[:, :l1], xk[:, l1:]
        h2 = jnp.maximum((x2 @ params["w2a"][k].astype(jnp.float32)) * params["s2a"][k]
                         + params["b2a"][k], 0.0)
        r2 = (h2 @ params["w2b"][k].astype(jnp.float32)) * params["s2b"][k] + params["b2b"][k]
        log_e2 = (CLAMP * 0.636) * jnp.arctan(r2[:, :l1] / CLAMP)
        y1 = jnp.exp(log_e2) * x1 + r2[:, l1:]
        h1 = jnp.maximum((y1 @ params["w1a"][k].astype(jnp.float32)) * params["s1a"][k]
                         + params["b1a"][k], 0.0)
        r1 = (h1 @ params["w1b"][k].astype(jnp.float32)) * params["s1b"][k] + params["b1b"][k]
        log_e1 = (CLAMP * 0.636) * jnp.arctan(r1[:, :l2] / CLAMP)
        y2 = jnp.exp(log_e1) * x2 + r1[:, l2:]
        x = jnp.concatenate([y1, y2], axis=1)
        jac = jac + jnp.sum(log_e1, axis=1) + jnp.sum(log_e2, axis=1)
    return x, jac


if __name__ == "__main__":
    key = jax.random.PRNGKey(0)
    k_x, k_p = jax.random.split(key)

    x = jax.random.normal(k_x, (BATCH, FEAT), jnp.float32)
    params = init_params(k_p)
    perms = make_permutations()

    z, jac = basic_module_forward(x, params, perms)
    jax.block_until_ready((z, jac))

    assert z.shape == (BATCH, FEAT) and jac.shape == (BATCH,)
    assert bool(jnp.all(jnp.isfinite(z))) and bool(jnp.all(jnp.isfinite(jac)))

    # Validate against the pure-JAX f32 reference (same int8-derived weights; the
    # only divergence is bf16 rounding of the MXU operands inside the kernel).
    z_ref, jac_ref = reference_forward(x, params, perms)
    np.testing.assert_allclose(np.asarray(z), np.asarray(z_ref), rtol=1e-1, atol=1e-1)
    np.testing.assert_allclose(np.asarray(jac), np.asarray(jac_ref), rtol=1e-1, atol=1e-1)

    print("KERNEL_OK")
</pallas_src>

<mosaic_0001>
module attributes {stable_mosaic.version = 11 : i64} {
  func.func @_fused_inn_kernel(%arg0: i32, %arg1: i32, %arg2: memref<8x256xf32, #tpu.memory_space<vmem>>, %arg3: memref<1x1x256xi32, #tpu.memory_space<vmem>>, %arg4: memref<1x128x256xi8, #tpu.memory_space<vmem>>, %arg5: memref<1x1x256xf32, #tpu.memory_space<vmem>>, %arg6: memref<1x1x256xf32, #tpu.memory_space<vmem>>, %arg7: memref<1x256x256xi8, #tpu.memory_space<vmem>>, %arg8: memref<1x1x256xf32, #tpu.memory_space<vmem>>, %arg9: memref<1x1x256xf32, #tpu.memory_space<vmem>>, %arg10: memref<1x128x256xi8, #tpu.memory_space<vmem>>, %arg11: memref<1x1x256xf32, #tpu.memory_space<vmem>>, %arg12: memref<1x1x256xf32, #tpu.memory_space<vmem>>, %arg13: memref<1x256x256xi8, #tpu.memory_space<vmem>>, %arg14: memref<1x1x256xf32, #tpu.memory_space<vmem>>, %arg15: memref<1x1x256xf32, #tpu.memory_space<vmem>>, %arg16: memref<8x256xf32, #tpu.memory_space<vmem>>, %arg17: memref<8x1xf32, #tpu.memory_space<vmem>>, %arg18: memref<8x256xf32, #tpu.memory_space<vmem>>) attributes {dimension_semantics = [#tpu.dimension_semantics<parallel>, #tpu.dimension_semantics<arbitrary>], iteration_bounds = array<i64: 1, 4>, scalar_prefetch = 0 : i64, scratch_operands = 1 : i64, tpu.core_type = #tpu.core_type<tc>, window_params = [{transform_indices = @transform_0, window_bounds = array<i64: 8, 256>}, {transform_indices = @transform_1, window_bounds = array<i64: 1, 1, 256>}, {transform_indices = @transform_2, window_bounds = array<i64: 1, 128, 256>}, {transform_indices = @transform_3, window_bounds = array<i64: 1, 1, 256>}, {transform_indices = @transform_4, window_bounds = array<i64: 1, 1, 256>}, {transform_indices = @transform_5, window_bounds = array<i64: 1, 256, 256>}, {transform_indices = @transform_6, window_bounds = array<i64: 1, 1, 256>}, {transform_indices = @transform_7, window_bounds = array<i64: 1, 1, 256>}, {transform_indices = @transform_8, window_bounds = array<i64: 1, 128, 256>}, {transform_indices = @transform_9, window_bounds = array<i64: 1, 1, 256>}, {transform_indices = @transform_10, window_bounds = array<i64: 1, 1, 256>}, {transform_indices = @transform_11, window_bounds = array<i64: 1, 256, 256>}, {transform_indices = @transform_12, window_bounds = array<i64: 1, 1, 256>}, {transform_indices = @transform_13, window_bounds = array<i64: 1, 1, 256>}, {transform_indices = @transform_14, window_bounds = array<i64: 8, 256>}, {transform_indices = @transform_15, window_bounds = array<i64: 8, 1>}]} {
    %c0_i32 = arith.constant 0 : i32
    %0 = arith.cmpi eq, %arg1, %c0_i32 : i32
    %1 = arith.extui %0 : i1 to i32
    %c0_i32_0 = arith.constant 0 : i32
    %2 = arith.cmpi ne, %1, %c0_i32_0 : i32
    scf.if %2 {
      %c0_66 = arith.constant 0 : index
      %c0_67 = arith.constant 0 : index
      %105 = vector.load %arg2[%c0_66, %c0_67] : memref<8x256xf32, #tpu.memory_space<vmem>>, vector<8x256xf32>
      %c0_68 = arith.constant 0 : index
      %c0_69 = arith.constant 0 : index
      %106 = vector.load %arg16[%c0_68, %c0_69] : memref<8x256xf32, #tpu.memory_space<vmem>>, vector<8x256xf32>
      tpu.vector_store %arg16[%c0_68, %c0_69], %105 {strides = array<i32>} : memref<8x256xf32, #tpu.memory_space<vmem>>, vector<8x256xf32>,
      %cst_70 = arith.constant 0.000000e+00 : f32
      %107 = vector.broadcast %cst_70 : f32 to vector<8x1xf32>
      %c0_71 = arith.constant 0 : index
      %c0_72 = arith.constant 0 : index
      %108 = vector.load %arg17[%c0_71, %c0_72] : memref<8x1xf32, #tpu.memory_space<vmem>>, vector<8x1xf32>
      tpu.vector_store %arg17[%c0_71, %c0_72], %107 {strides = array<i32>} : memref<8x1xf32, #tpu.memory_space<vmem>>, vector<8x1xf32>,
    } else {
    }
    %c0 = arith.constant 0 : index
    %c0_1 = arith.constant 0 : index
    %3 = vector.load %arg16[%c0, %c0_1] : memref<8x256xf32, #tpu.memory_space<vmem>>, vector<8x256xf32>
    %4 = arith.truncf %3 : vector<8x256xf32> to vector<8x256xbf16>
    %c0_2 = arith.constant 0 : index
    %c0_3 = arith.constant 0 : index
    %c0_4 = arith.constant 0 : index
    %5 = vector.load %arg3[%c0_2, %c0_3, %c0_4] : memref<1x1x256xi32, #tpu.memory_space<vmem>>, vector<1x1x256xi32>
    %6 = vector.shape_cast %5 : vector<1x1x256xi32> to vector<1x256xi32>
    %7 = tpu.iota {dimensions = array<i32: 0>} : vector<256x256xi32>
    %8 = vector.broadcast %6 : vector<1x256xi32> to vector<256x256xi32>
    %9 = arith.cmpi eq, %7, %8 : vector<256x256xi32>
    %10 = arith.extui %9 : vector<256x256xi1> to vector<256x256xi32>
    %11 = arith.sitofp %10 : vector<256x256xi32> to vector<256x256xf32>
    %12 = arith.truncf %11 : vector<256x256xf32> to vector<256x256xbf16>
    %cst = arith.constant dense<0.000000e+00> : vector<8x256xf32>
    %13 = tpu.matmul %4, %12, %cst {dimension_numbers = #tpu.dot_dimension_numbers<[1], [0], [0], [1], [0, 0, 1, 1], [], []>} : vector<8x256xbf16>, vector<256x256xbf16>, vector<8x256xf32> -> vector<8x256xf32>
    %c0_5 = arith.constant 0 : index
    %c0_6 = arith.constant 0 : index
    %14 = vector.load %arg18[%c0_5, %c0_6] : memref<8x256xf32, #tpu.memory_space<vmem>>, vector<8x256xf32>
    tpu.vector_store %arg18[%c0_5, %c0_6], %13 {strides = array<i32>} : memref<8x256xf32, #tpu.memory_space<vmem>>, vector<8x256xf32>,
    %c0_7 = arith.constant 0 : index
    %c0_8 = arith.constant 0 : index
    %15 = vector.load %arg18[%c0_7, %c0_8] : memref<8x256xf32, #tpu.memory_space<vmem>>, vector<8x128xf32>
    %c0_9 = arith.constant 0 : index
    %c128 = arith.constant 128 : index
    %16 = vector.load %arg18[%c0_9, %c128] : memref<8x256xf32, #tpu.memory_space<vmem>>, vector<8x128xf32>
    %c0_10 = arith.constant 0 : index
    %c0_11 = arith.constant 0 : index
    %c0_12 = arith.constant 0 : index
    %17 = vector.load %arg4[%c0_10, %c0_11, %c0_12] : memref<1x128x256xi8, #tpu.memory_space<vmem>>, vector<1x128x256xi8>
    %18 = vector.shape_cast %17 : vector<1x128x256xi8> to vector<128x256xi8>
    %19 = arith.sitofp %18 : vector<128x256xi8> to vector<128x256xf32>
    %20 = arith.truncf %19 : vector<128x256xf32> to vector<128x256xbf16>
    %21 = arith.truncf %16 : vector<8x128xf32> to vector<8x128xbf16>
    %cst_13 = arith.constant dense<0.000000e+00> : vector<8x256xf32>
    %22 = tpu.matmul %21, %20, %cst_13 {dimension_numbers = #tpu.dot_dimension_numbers<[1], [0], [0], [1], [0, 0, 1, 1], [], []>} : vector<8x128xbf16>, vector<128x256xbf16>, vector<8x256xf32> -> vector<8x256xf32>
    %c0_14 = arith.constant 0 : index
    %c0_15 = arith.constant 0 : index
    %c0_16 = arith.constant 0 : index
    %23 = vector.load %arg5[%c0_14, %c0_15, %c0_16] : memref<1x1x256xf32, #tpu.memory_space<vmem>>, vector<1x1x256xf32>
    %24 = vector.shape_cast %23 : vector<1x1x256xf32> to vector<1x256xf32>
    %25 = vector.broadcast %24 : vector<1x256xf32> to vector<8x256xf32>
    %26 = arith.mulf %22, %25 : vector<8x256xf32>
    %c0_17 = arith.constant 0 : index
    %c0_18 = arith.constant 0 : index
    %c0_19 = arith.constant 0 : index
    %27 = vector.load %arg6[%c0_17, %c0_18, %c0_19] : memref<1x1x256xf32, #tpu.memory_space<vmem>>, vector<1x1x256xf32>
    %28 = vector.shape_cast %27 : vector<1x1x256xf32> to vector<1x256xf32>
    %29 = vector.broadcast %28 : vector<1x256xf32> to vector<8x256xf32>
    %30 = arith.addf %26, %29 : vector<8x256xf32>
    %cst_20 = arith.constant 0.000000e+00 : f32
    %31 = vector.broadcast %cst_20 : f32 to vector<8x256xf32>
    %32 = arith.maximumf %30, %31 : vector<8x256xf32>
    %c0_21 = arith.constant 0 : index
    %c0_22 = arith.constant 0 : index
    %c0_23 = arith.constant 0 : index
    %33 = vector.load %arg7[%c0_21, %c0_22, %c0_23] : memref<1x256x256xi8, #tpu.memory_space<vmem>>, vector<1x256x256xi8>
    %34 = vector.shape_cast %33 : vector<1x256x256xi8> to vector<256x256xi8>
    %35 = arith.sitofp %34 : vector<256x256xi8> to vector<256x256xf32>
    %36 = arith.truncf %35 : vector<256x256xf32> to vector<256x256xbf16>
    %37 = arith.truncf %32 : vector<8x256xf32> to vector<8x256xbf16>
    %cst_24 = arith.constant dense<0.000000e+00> : vector<8x256xf32>
    %38 = tpu.matmul %37, %36, %cst_24 {dimension_numbers = #tpu.dot_dimension_numbers<[1], [0], [0], [1], [0, 0, 1, 1], [], []>} : vector<8x256xbf16>, vector<256x256xbf16>, vector<8x256xf32> -> vector<8x256xf32>
    %c0_25 = arith.constant 0 : index
    %c0_26 = arith.constant 0 : index
    %c0_27 = arith.constant 0 : index
    %39 = vector.load %arg8[%c0_25, %c0_26, %c0_27] : memref<1x1x256xf32, #tpu.memory_space<vmem>>, vector<1x1x256xf32>
    %40 = vector.shape_cast %39 : vector<1x1x256xf32> to vector<1x256xf32>
    %41 = vector.broadcast %40 : vector<1x256xf32> to vector<8x256xf32>
    %42 = arith.mulf %38, %41 : vector<8x256xf32>
    %c0_28 = arith.constant 0 : index
    %c0_29 = arith.constant 0 : index
    %c0_30 = arith.constant 0 : index
    %43 = vector.load %arg9[%c0_28, %c0_29, %c0_30] : memref<1x1x256xf32, #tpu.memory_space<vmem>>, vector<1x1x256xf32>
    %44 = vector.shape_cast %43 : vector<1x1x256xf32> to vector<1x256xf32>
    %45 = vector.broadcast %44 : vector<1x256xf32> to vector<8x256xf32>
    %46 = arith.addf %42, %45 : vector<8x256xf32>
    %47 = vector.extract_strided_slice %46 {offsets = [0, 0], sizes = [8, 128], strides = [1, 1]} : vector<8x256xf32> to vector<8x128xf32>
    %cst_31 = arith.constant 2.000000e+00 : f32
    %48 = vector.broadcast %cst_31 : f32 to vector<8x128xf32>
    %49 = math.atan2 %47, %48 : vector<8x128xf32>
    %cst_32 = arith.constant 1.272000e+00 : f32
    %50 = vector.broadcast %cst_32 : f32 to vector<8x128xf32>
    %51 = arith.mulf %50, %49 : vector<8x128xf32>
    %52 = math.exp %51 : vector<8x128xf32>
    %53 = arith.mulf %52, %15 : vector<8x128xf32>
    %54 = vector.extract_strided_slice %46 {offsets = [0, 128], sizes = [8, 128], strides = [1, 1]} : vector<8x256xf32> to vector<8x128xf32>
    %55 = arith.addf %53, %54 : vector<8x128xf32>
    %c0_33 = arith.constant 0 : index
    %c0_34 = arith.constant 0 : index
    %c0_35 = arith.constant 0 : index
    %56 = vector.load %arg10[%c0_33, %c0_34, %c0_35] : memref<1x128x256xi8, #tpu.memory_space<vmem>>, vector<1x128x256xi8>
    %57 = vector.shape_cast %56 : vector<1x128x256xi8> to vector<128x256xi8>
    %58 = arith.sitofp %57 : vector<128x256xi8> to vector<128x256xf32>
    %59 = arith.truncf %58 : vector<128x256xf32> to vector<128x256xbf16>
    %60 = arith.truncf %55 : vector<8x128xf32> to vector<8x128xbf16>
    %cst_36 = arith.constant dense<0.000000e+00> : vector<8x256xf32>
    %61 = tpu.matmul %60, %59, %cst_36 {dimension_numbers = #tpu.dot_dimension_numbers<[1], [0], [0], [1], [0, 0, 1, 1], [], []>} : vector<8x128xbf16>, vector<128x256xbf16>, vector<8x256xf32> -> vector<8x256xf32>
    %c0_37 = arith.constant 0 : index
    %c0_38 = arith.constant 0 : index
    %c0_39 = arith.constant 0 : index
    %62 = vector.load %arg11[%c0_37, %c0_38, %c0_39] : memref<1x1x256xf32, #tpu.memory_space<vmem>>, vector<1x1x256xf32>
    %63 = vector.shape_cast %62 : vector<1x1x256xf32> to vector<1x256xf32>
    %64 = vector.broadcast %63 : vector<1x256xf32> to vector<8x256xf32>
    %65 = arith.mulf %61, %64 : vector<8x256xf32>
    %c0_40 = arith.constant 0 : index
    %c0_41 = arith.constant 0 : index
    %c0_42 = arith.constant 0 : index
    %66 = vector.load %arg12[%c0_40, %c0_41, %c0_42] : memref<1x1x256xf32, #tpu.memory_space<vmem>>, vector<1x1x256xf32>
    %67 = vector.shape_cast %66 : vector<1x1x256xf32> to vector<1x256xf32>
    %68 = vector.broadcast %67 : vector<1x256xf32> to vector<8x256xf32>
    %69 = arith.addf %65, %68 : vector<8x256xf32>
    %cst_43 = arith.constant 0.000000e+00 : f32
    %70 = vector.broadcast %cst_43 : f32 to vector<8x256xf32>
    %71 = arith.maximumf %69, %70 : vector<8x256xf32>
    %c0_44 = arith.constant 0 : index
    %c0_45 = arith.constant 0 : index
    %c0_46 = arith.constant 0 : index
    %72 = vector.load %arg13[%c0_44, %c0_45, %c0_46] : memref<1x256x256xi8, #tpu.memory_space<vmem>>, vector<1x256x256xi8>
    %73 = vector.shape_cast %72 : vector<1x256x256xi8> to vector<256x256xi8>
    %74 = arith.sitofp %73 : vector<256x256xi8> to vector<256x256xf32>
    %75 = arith.truncf %74 : vector<256x256xf32> to vector<256x256xbf16>
    %76 = arith.truncf %71 : vector<8x256xf32> to vector<8x256xbf16>
    %cst_47 = arith.constant dense<0.000000e+00> : vector<8x256xf32>
    %77 = tpu.matmul %76, %75, %cst_47 {dimension_numbers = #tpu.dot_dimension_numbers<[1], [0], [0], [1], [0, 0, 1, 1], [], []>} : vector<8x256xbf16>, vector<256x256xbf16>, vector<8x256xf32> -> vector<8x256xf32>
    %c0_48 = arith.constant 0 : index
    %c0_49 = arith.constant 0 : index
    %c0_50 = arith.constant 0 : index
    %78 = vector.load %arg14[%c0_48, %c0_49, %c0_50] : memref<1x1x256xf32, #tpu.memory_space<vmem>>, vector<1x1x256xf32>
    %79 = vector.shape_cast %78 : vector<1x1x256xf32> to vector<1x256xf32>
    %80 = vector.broadcast %79 : vector<1x256xf32> to vector<8x256xf32>
    %81 = arith.mulf %77, %80 : vector<8x256xf32>
    %c0_51 = arith.constant 0 : index
    %c0_52 = arith.constant 0 : index
    %c0_53 = arith.constant 0 : index
    %82 = vector.load %arg15[%c0_51, %c0_52, %c0_53] : memref<1x1x256xf32, #tpu.memory_space<vmem>>, vector<1x1x256xf32>
    %83 = vector.shape_cast %82 : vector<1x1x256xf32> to vector<1x256xf32>
    %84 = vector.broadcast %83 : vector<1x256xf32> to vector<8x256xf32>
    %85 = arith.addf %81, %84 : vector<8x256xf32>
    %86 = vector.extract_strided_slice %85 {offsets = [0, 0], sizes = [8, 128], strides = [1, 1]} : vector<8x256xf32> to vector<8x128xf32>
    %cst_54 = arith.constant 2.000000e+00 : f32
    %87 = vector.broadcast %cst_54 : f32 to vector<8x128xf32>
    %88 = math.atan2 %86, %87 : vector<8x128xf32>
    %cst_55 = arith.constant 1.272000e+00 : f32
    %89 = vector.broadcast %cst_55 : f32 to vector<8x128xf32>
    %90 = arith.mulf %89, %88 : vector<8x128xf32>
    %91 = math.exp %90 : vector<8x128xf32>
    %92 = arith.mulf %91, %16 : vector<8x128xf32>
    %93 = vector.extract_strided_slice %85 {offsets = [0, 128], sizes = [8, 128], strides = [1, 1]} : vector<8x256xf32> to vector<8x128xf32>
    %94 = arith.addf %92, %93 : vector<8x128xf32>
    %c0_56 = arith.constant 0 : index
    %c0_57 = arith.constant 0 : index
    %95 = vector.load %arg16[%c0_56, %c0_57] : memref<8x256xf32, #tpu.memory_space<vmem>>, vector<8x128xf32>
    tpu.vector_store %arg16[%c0_56, %c0_57], %55 {strides = array<i32>} : memref<8x256xf32, #tpu.memory_space<vmem>>, vector<8x128xf32>,
    %c0_58 = arith.constant 0 : index
    %c128_59 = arith.constant 128 : index
    %96 = vector.load %arg16[%c0_58, %c128_59] : memref<8x256xf32, #tpu.memory_space<vmem>>, vector<8x128xf32>
    tpu.vector_store %arg16[%c0_58, %c128_59], %94 {strides = array<i32>} : memref<8x256xf32, #tpu.memory_space<vmem>>, vector<8x128xf32>,
    %c0_60 = arith.constant 0 : index
    %c0_61 = arith.constant 0 : index
    %97 = vector.load %arg17[%c0_60, %c0_61] : memref<8x1xf32, #tpu.memory_space<vmem>>, vector<8x1xf32>
    %cst_62 = arith.constant dense<0.000000e+00> : vector<8xf32>
    %98 = vector.multi_reduction <add>, %90, %cst_62 [1] : vector<8x128xf32> to vector<8xf32>
    %99 = vector.shape_cast %98 : vector<8xf32> to vector<8x1xf32>
    %cst_63 = arith.constant dense<0.000000e+00> : vector<8xf32>
    %100 = vector.multi_reduction <add>, %51, %cst_63 [1] : vector<8x128xf32> to vector<8xf32>
    %101 = vector.shape_cast %100 : vector<8xf32> to vector<8x1xf32>
    %102 = arith.addf %99, %101 : vector<8x1xf32>
    %103 = arith.addf %97, %102 : vector<8x1xf32>
    %c0_64 = arith.constant 0 : index
    %c0_65 = arith.constant 0 : index
    %104 = vector.load %arg17[%c0_64, %c0_65] : memref<8x1xf32, #tpu.memory_space<vmem>>, vector<8x1xf32>
    tpu.vector_store %arg17[%c0_64, %c0_65], %103 {strides = array<i32>} : memref<8x1xf32, #tpu.memory_space<vmem>>, vector<8x1xf32>,
    return
  }
  func.func @transform_0(%arg0: i32, %arg1: i32) -> (i32, i32) {
    %c0_i32 = arith.constant 0 : i32
    %c0_i32_0 = arith.constant 0 : i32
    return %arg0, %c0_i32 : i32, i32
  }
  func.func @transform_1(%arg0: i32, %arg1: i32) -> (i32, i32, i32) {
    %c0_i32 = arith.constant 0 : i32
    %c0_i32_0 = arith.constant 0 : i32
    %c0_i32_1 = arith.constant 0 : i32
    return %arg1, %c0_i32, %c0_i32_0 : i32, i32, i32
  }
  func.func @transform_2(%arg0: i32, %arg1: i32) -> (i32, i32, i32) {
    %c0_i32 = arith.constant 0 : i32
    %c0_i32_0 = arith.constant 0 : i32
    %c0_i32_1 = arith.constant 0 : i32
    return %arg1, %c0_i32, %c0_i32_0 : i32, i32, i32
  }
  func.func @transform_3(%arg0: i32, %arg1: i32) -> (i32, i32, i32) {
    %c0_i32 = arith.constant 0 : i32
    %c0_i32_0 = arith.constant 0 : i32
    %c0_i32_1 = arith.constant 0 : i32
    return %arg1, %c0_i32, %c0_i32_0 : i32, i32, i32
  }
  func.func @transform_4(%arg0: i32, %arg1: i32) -> (i32, i32, i32) {
    %c0_i32 = arith.constant 0 : i32
    %c0_i32_0 = arith.constant 0 : i32
    %c0_i32_1 = arith.constant 0 : i32
    return %arg1, %c0_i32, %c0_i32_0 : i32, i32, i32
  }
  func.func @transform_5(%arg0: i32, %arg1: i32) -> (i32, i32, i32) {
    %c0_i32 = arith.constant 0 : i32
    %c0_i32_0 = arith.constant 0 : i32
    %c0_i32_1 = arith.constant 0 : i32
    return %arg1, %c0_i32, %c0_i32_0 : i32, i32, i32
  }
  func.func @transform_6(%arg0: i32, %arg1: i32) -> (i32, i32, i32) {
    %c0_i32 = arith.constant 0 : i32
    %c0_i32_0 = arith.constant 0 : i32
    %c0_i32_1 = arith.constant 0 : i32
    return %arg1, %c0_i32, %c0_i32_0 : i32, i32, i32
  }
  func.func @transform_7(%arg0: i32, %arg1: i32) -> (i32, i32, i32) {
    %c0_i32 = arith.constant 0 : i32
    %c0_i32_0 = arith.constant 0 : i32
    %c0_i32_1 = arith.constant 0 : i32
    return %arg1, %c0_i32, %c0_i32_0 : i32, i32, i32
  }
  func.func @transform_8(%arg0: i32, %arg1: i32) -> (i32, i32, i32) {
    %c0_i32 = arith.constant 0 : i32
    %c0_i32_0 = arith.constant 0 : i32
    %c0_i32_1 = arith.constant 0 : i32
    return %arg1, %c0_i32, %c0_i32_0 : i32, i32, i32
  }
  func.func @transform_9(%arg0: i32, %arg1: i32) -> (i32, i32, i32) {
    %c0_i32 = arith.constant 0 : i32
    %c0_i32_0 = arith.constant 0 : i32
    %c0_i32_1 = arith.constant 0 : i32
    return %arg1, %c0_i32, %c0_i32_0 : i32, i32, i32
  }
  func.func @transform_10(%arg0: i32, %arg1: i32) -> (i32, i32, i32) {
    %c0_i32 = arith.constant 0 : i32
    %c0_i32_0 = arith.constant 0 : i32
    %c0_i32_1 = arith.constant 0 : i32
    return %arg1, %c0_i32, %c0_i32_0 : i32, i32, i32
  }
  func.func @transform_11(%arg0: i32, %arg1: i32) -> (i32, i32, i32) {
    %c0_i32 = arith.constant 0 : i32
    %c0_i32_0 = arith.constant 0 : i32
    %c0_i32_1 = arith.constant 0 : i32
    return %arg1, %c0_i32, %c0_i32_0 : i32, i32, i32
  }
  func.func @transform_12(%arg0: i32, %arg1: i32) -> (i32, i32, i32) {
    %c0_i32 = arith.constant 0 : i32
    %c0_i32_0 = arith.constant 0 : i32
    %c0_i32_1 = arith.constant 0 : i32
    return %arg1, %c0_i32, %c0_i32_0 : i32, i32, i32
  }
  func.func @transform_13(%arg0: i32, %arg1: i32) -> (i32, i32, i32) {
    %c0_i32 = arith.constant 0 : i32
    %c0_i32_0 = arith.constant 0 : i32
    %c0_i32_1 = arith.constant 0 : i32
    return %arg1, %c0_i32, %c0_i32_0 : i32, i32, i32
  }
  func.func @transform_14(%arg0: i32, %arg1: i32) -> (i32, i32) {
    %c0_i32 = arith.constant 0 : i32
    %c0_i32_0 = arith.constant 0 : i32
    return %arg0, %c0_i32 : i32, i32
  }
  func.func @transform_15(%arg0: i32, %arg1: i32) -> (i32, i32) {
    %c0_i32 = arith.constant 0 : i32
    %c0_i32_0 = arith.constant 0 : i32
    return %arg0, %c0_i32 : i32, i32
  }
}

</mosaic_0001>

<llo_original>
// kernel: basic_module_forward.1
$region0: #{basic_module_forward.1}
  #allocation0 [shape = 'u32[]', space=smem, size = 0x4, offset = 0x4, fixed_abs, tag = 'smem constant byte address 0x4 - core index']
  #allocation1 [shape = 'u32[144,128]{1,0:T(1,128)}', space=vmem, size = 0x12000, scoped, tag = 'internal scratch']
  #allocation2 [shape = 'f32[8,256]{1,0:T(8,128)}', space=vmem, size = 0x2000, scoped, tag = 'scratch operand']
  %s0 = inlined_call_operand.hbm [shape: f32[8,256], index: 0, kind: input, shape index: {}]
  %s1 = inlined_call_operand.vmem [shape: s32[4,1,256], index: 1, kind: input, shape index: {}]
  %s2 = inlined_call_operand.hbm [shape: s8[4,128,256], index: 2, kind: input, shape index: {}]
  %s3 = inlined_call_operand.vmem [shape: f32[4,1,256], index: 3, kind: input, shape index: {}]
  %s4 = inlined_call_operand.hbm [shape: f32[4,1,256], index: 4, kind: input, shape index: {}]
  %s5 = inlined_call_operand.hbm [shape: s8[4,256,256], index: 5, kind: input, shape index: {}]
  %s6 = inlined_call_operand.vmem [shape: f32[4,1,256], index: 6, kind: input, shape index: {}]
  %s7 = inlined_call_operand.hbm [shape: f32[4,1,256], index: 7, kind: input, shape index: {}]
  %s8 = inlined_call_operand.hbm [shape: s8[4,128,256], index: 8, kind: input, shape index: {}]
  %s9 = inlined_call_operand.hbm [shape: f32[4,1,256], index: 9, kind: input, shape index: {}]
  %s10 = inlined_call_operand.hbm [shape: f32[4,1,256], index: 10, kind: input, shape index: {}]
  %s11 = inlined_call_operand.hbm [shape: s8[4,256,256], index: 11, kind: input, shape index: {}]
  %s12 = inlined_call_operand.hbm [shape: f32[4,1,256], index: 12, kind: input, shape index: {}]
  %s13 = inlined_call_operand.hbm [shape: f32[4,1,256], index: 13, kind: input, shape index: {}]
  %s14 = inlined_call_operand.hbm [shape: f32[8,256], index: 14, kind: output, shape index: {0}]
  %s15 = inlined_call_operand.vmem [shape: f32[8,1], index: 15, kind: output, shape index: {1}]
  %16 = xla_tuple %s14, %s15
  %s17 = sld [smem:[#allocation0]]
  $region145: #{basic_module_forward.1} parent=0
    _
  %s19 = ssub.s32 1, %s17
  %s20 = scalar_select 0, %s19, %s17
  $region1: #{basic_module_forward.1} parent=0
    #allocation3 [shape = 'u8[8192]{0}', space=vmem, size = 0x2000, scoped, tag = 'input window, operand 0, single buffered']
    #allocation4 [shape = 's32[2]{0}', space=sflag, size = 0x8, scoped, tag = 'scoped memory for basic_module_forward.1']
    #allocation5 [shape = 's32[2]{0}', space=sflag, size = 0x8, scoped, tag = 'scoped memory for basic_module_forward.1']
    #allocation6 [shape = 'u8[65536]{0}', space=vmem, size = 0x10000, scoped, tag = 'input window, operand 2']
    #allocation7 [shape = 's32[2]{0}', space=sflag, size = 0x8, scoped, tag = 'scoped memory for basic_module_forward.1']
    #allocation8 [shape = 'u8[2048]{0}', space=vmem, size = 0x800, scoped, tag = 'input window, operand 4']
    #allocation9 [shape = 'u8[131072]{0}', space=vmem, size = 0x20000, scoped, tag = 'input window, operand 5']
    #allocation10 [shape = 's32[2]{0}', space=sflag, size = 0x8, scoped, tag = 'scoped memory for basic_module_forward.1']
    #allocation11 [shape = 'u8[2048]{0}', space=vmem, size = 0x800, scoped, tag = 'input window, operand 7']
    #allocation12 [shape = 'u8[65536]{0}', space=vmem, size = 0x10000, scoped, tag = 'input window, operand 8']
    #allocation13 [shape = 's32[2]{0}', space=sflag, size = 0x8, scoped, tag = 'scoped memory for basic_module_forward.1']
    #allocation14 [shape = 'u8[2048]{0}', space=vmem, size = 0x800, scoped, tag = 'input window, operand 9']
    #allocation15 [shape = 'u8[2048]{0}', space=vmem, size = 0x800, scoped, tag = 'input window, operand 10']
    #allocation16 [shape = 's32[2]{0}', space=sflag, size = 0x8, scoped, tag = 'scoped memory for basic_module_forward.1']
    #allocation17 [shape = 'u8[131072]{0}', space=vmem, size = 0x20000, scoped, tag = 'input window, operand 11']
    #allocation18 [shape = 'u8[2048]{0}', space=vmem, size = 0x800, scoped, tag = 'input window, operand 12']
    #allocation19 [shape = 's32[2]{0}', space=sflag, size = 0x8, scoped, tag = 'scoped memory for basic_module_forward.1']
    #allocation20 [shape = 'u8[2048]{0}', space=vmem, size = 0x800, scoped, tag = 'input window, operand 13']
    #allocation21 [shape = 'u8[8192]{0}', space=vmem, size = 0x2000, scoped, tag = 'output window, operand 0, single buffered']
    %21 = vsyncpa [#allocation4], 0
    %22 = vsyncpa [#allocation7], 0
    %s23 = scalar_lea.sflag [#allocation7], 1
    %24 = vsyncpa %s23, 0
    %25 = vsyncpa [#allocation10], 0
    %s26 = scalar_lea.sflag [#allocation10], 1
    %27 = vsyncpa %s26, 0
    %28 = vsyncpa [#allocation13], 0
    %s29 = scalar_lea.sflag [#allocation13], 1
    %30 = vsyncpa %s29, 0
    %31 = vsyncpa [#allocation16], 0
    %s32 = scalar_lea.sflag [#allocation16], 1
    %33 = vsyncpa %s32, 0
    %34 = vsyncpa [#allocation19], 0
    %s35 = scalar_lea.sflag [#allocation19], 1
    %36 = vsyncpa %s35, 0
    %37 = vsyncpa [#allocation5], 0
    loop: start=0, step=1, limit=6
    $region2: #{basic_module_forward.1} parent=1 // loop_pre_header
      _
    $region3: #{basic_module_forward.1} parent=1 // loop_header
      %s39 = sphi 0, %s43
      %p40 = scmp.ge.s32.totalorder %s39, 6
      %s46 = sphi 0, %s58
      %s47 = sphi 0, %s54
      %s48 = sphi 0, %s46
      %s49 = sphi 0, %s47
      %s50 = sphi 0, %s48
      %s51 = sphi 0, %s49
      %s61 = sphi 0, %s63
      %s64 = sphi 0, %s61
      %s65 = sphi 0, %s64
      %s81 = sphi 0, %s65
      %s87 = sphi 0, %s89
      %s90 = sphi 0, %s87
      %s91 = sphi 0, %s90
      %s107 = sphi 0, %s91
      %s113 = sphi 0, %s115
      %s116 = sphi 0, %s113
      %s117 = sphi 0, %s116
      %s133 = sphi 0, %s117
      %s139 = sphi 0, %s141
      %s142 = sphi 0, %s139
      %s143 = sphi 0, %s142
      %s159 = sphi 0, %s143
      %s165 = sphi 0, %s167
      %s168 = sphi 0, %s165
      %s169 = sphi 0, %s168
      %s185 = sphi 0, %s169
      %s191 = sphi 0, %s193
      %s194 = sphi 0, %s191
      %s195 = sphi 0, %s194
      %s211 = sphi 0, %s195
      %s217 = sphi 0, %s219
      %s220 = sphi 0, %s217
      %s221 = sphi 0, %s220
      %s237 = sphi 0, %s221
      %s243 = sphi 0, %s245
      %s246 = sphi 0, %s243
      %s247 = sphi 0, %s246
      %s263 = sphi 0, %s247
      %s269 = sphi 0, %s271
      %s272 = sphi 0, %s269
      %s273 = sphi 0, %s272
      %s289 = sphi 0, %s273
      %s295 = sphi 0, %s297
      %s298 = sphi 0, %s295
      %s299 = sphi 0, %s298
      %s315 = sphi 0, %s299
      %s321 = sphi 0, %s323
      %s324 = sphi 0, %s321
      %s325 = sphi 0, %s324
      %s341 = sphi 0, %s325
      %s347 = sphi 0, %s349
      %s350 = sphi 0, %s347
      %s351 = sphi 0, %s350
      %s367 = sphi 0, %s351
      %s373 = sphi 0, %s375
      %s376 = sphi 0, %s373
      %s377 = sphi 0, %s376
      %s393 = sphi 0, %s377
      %s399 = sphi 0, %s401
      %s402 = sphi 0, %s399
      %s403 = sphi 0, %s402
      %s419 = sphi 0, %s403
      %s425 = sphi 0, %s427
      %s428 = sphi 0, %s425
      %s429 = sphi 0, %s428
      %s445 = sphi 0, %s429
      %s451 = sphi 0, %s453
      %s454 = sphi 0, %s451
      %s455 = sphi 0, %s454
      %s471 = sphi 0, %s455
    $region4: #{basic_module_forward.1} parent=1 // loop_header_branch
      %42 = sbr.rel (%p40) target = $region8
    $region5: #{basic_module_forward.1} parent=1 // loop_body
      %s44 = ssub.s32 %s39, 1
      %s45 = ssub.s32 %s39, 2
      %s52 = sadd.s32 1, %s47
      %p53 = scmp.ge.s32.totalorder %s52, 4
      %s54 = scalar_select %p53, 0, %s52
      %s55 = sadd.s32 1, %s46
      %s56 = scalar_select %p53, %s55, %s46
      %p57 = scmp.ge.s32.totalorder %s56, 1
      %s58 = scalar_select %p57, 0, %s56
      %s59 = ssub.s32 %s46, %s58
      %p60 = scmp.eq.s32.totalorder %s59, 0
      %s62 = sadd.s32 %s61, 1
      %s63 = scalar_select %p60, %s61, %s62
      %p66 = pneg %p60
      %p67 = scmp.eq.s32.totalorder %s39, 3
      %p68 = por %p66, %p67
      %p69 = scmp.ne.s32.totalorder %s61, %s64
      %p70 = scmp.eq.s32.totalorder %s39, 0
      %p71 = por %p69, %p70
      %p72 = scmp.ne.s32.totalorder %s61, %s64
      %p73 = scmp.eq.s32.totalorder %s44, 3
      %p74 = por %p72, %p73
      %p75 = scmp.ne.s32.totalorder %s64, %s65
      %p76 = scmp.eq.s32.totalorder %s44, 0
      %p77 = por %p75, %p76
      %p78 = scmp.ne.s32.totalorder %s64, %s65
      %p79 = scmp.eq.s32.totalorder %s45, 3
      %p80 = por %p78, %p79
      %p82 = scmp.ne.s32.totalorder %s65, %s81
      %p83 = scmp.eq.s32.totalorder %s45, 0
      %p84 = por %p82, %p83
      %s85 = ssub.s32 %s47, %s54
      %p86 = scmp.eq.s32.totalorder %s85, 0
      %s88 = sadd.s32 %s87, 1
      %s89 = scalar_select %p86, %s87, %s88
      %p92 = pneg %p86
      %p93 = scmp.eq.s32.totalorder %s39, 3
      %p94 = por %p92, %p93
      %p95 = scmp.ne.s32.totalorder %s87, %s90
      %p96 = scmp.eq.s32.totalorder %s39, 0
      %p97 = por %p95, %p96
      %p98 = scmp.ne.s32.totalorder %s87, %s90
      %p99 = scmp.eq.s32.totalorder %s44, 3
      %p100 = por %p98, %p99
      %p101 = scmp.ne.s32.totalorder %s90, %s91
      %p102 = scmp.eq.s32.totalorder %s44, 0
      %p103 = por %p101, %p102
      %p104 = scmp.ne.s32.totalorder %s90, %s91
      %p105 = scmp.eq.s32.totalorder %s45, 3
      %p106 = por %p104, %p105
      %p108 = scmp.ne.s32.totalorder %s91, %s107
      %p109 = scmp.eq.s32.totalorder %s45, 0
      %p110 = por %p108, %p109
      %s111 = ssub.s32 %s47, %s54
      %p112 = scmp.eq.s32.totalorder %s111, 0
      %s114 = sadd.s32 %s113, 1
      %s115 = scalar_select %p112, %s113, %s114
      %p118 = pneg %p112
      %p119 = scmp.eq.s32.totalorder %s39, 3
      %p120 = por %p118, %p119
      %p121 = scmp.ne.s32.totalorder %s113, %s116
      %p122 = scmp.eq.s32.totalorder %s39, 0
      %p123 = por %p121, %p122
      %p124 = scmp.ne.s32.totalorder %s113, %s116
      %p125 = scmp.eq.s32.totalorder %s44, 3
      %p126 = por %p124, %p125
      %p127 = scmp.ne.s32.totalorder %s116, %s117
      %p128 = scmp.eq.s32.totalorder %s44, 0
      %p129 = por %p127, %p128
      %p130 = scmp.ne.s32.totalorder %s116, %s117
      %p131 = scmp.eq.s32.totalorder %s45, 3
      %p132 = por %p130, %p131
      %p134 = scmp.ne.s32.totalorder %s117, %s133
      %p135 = scmp.eq.s32.totalorder %s45, 0
      %p136 = por %p134, %p135
      %s137 = ssub.s32 %s47, %s54
      %p138 = scmp.eq.s32.totalorder %s137, 0
      %s140 = sadd.s32 %s139, 1
      %s141 = scalar_select %p138, %s139, %s140
      %p144 = pneg %p138
      %p145 = scmp.eq.s32.totalorder %s39, 3
      %p146 = por %p144, %p145
      %p147 = scmp.ne.s32.totalorder %s139, %s142
      %p148 = scmp.eq.s32.totalorder %s39, 0
      %p149 = por %p147, %p148
      %p150 = scmp.ne.s32.totalorder %s139, %s142
      %p151 = scmp.eq.s32.totalorder %s44, 3
      %p152 = por %p150, %p151
      %p153 = scmp.ne.s32.totalorder %s142, %s143
      %p154 = scmp.eq.s32.totalorder %s44, 0
      %p155 = por %p153, %p154
      %p156 = scmp.ne.s32.totalorder %s142, %s143
      %p157 = scmp.eq.s32.totalorder %s45, 3
      %p158 = por %p156, %p157
      %p160 = scmp.ne.s32.totalorder %s143, %s159
      %p161 = scmp.eq.s32.totalorder %s45, 0
      %p162 = por %p160, %p161
      %s163 = ssub.s32 %s47, %s54
      %p164 = scmp.eq.s32.totalorder %s163, 0
      %s166 = sadd.s32 %s165, 1
      %s167 = scalar_select %p164, %s165, %s166
      %p170 = pneg %p164
      %p171 = scmp.eq.s32.totalorder %s39, 3
      %p172 = por %p170, %p171
      %p173 = scmp.ne.s32.totalorder %s165, %s168
      %p174 = scmp.eq.s32.totalorder %s39, 0
      %p175 = por %p173, %p174
      %p176 = scmp.ne.s32.totalorder %s165, %s168
      %p177 = scmp.eq.s32.totalorder %s44, 3
      %p178 = por %p176, %p177
      %p179 = scmp.ne.s32.totalorder %s168, %s169
      %p180 = scmp.eq.s32.totalorder %s44, 0
      %p181 = por %p179, %p180
      %p182 = scmp.ne.s32.totalorder %s168, %s169
      %p183 = scmp.eq.s32.totalorder %s45, 3
      %p184 = por %p182, %p183
      %p186 = scmp.ne.s32.totalorder %s169, %s185
      %p187 = scmp.eq.s32.totalorder %s45, 0
      %p188 = por %p186, %p187
      %s189 = ssub.s32 %s47, %s54
      %p190 = scmp.eq.s32.totalorder %s189, 0
      %s192 = sadd.s32 %s191, 1
      %s193 = scalar_select %p190, %s191, %s192
      %p196 = pneg %p190
      %p197 = scmp.eq.s32.totalorder %s39, 3
      %p198 = por %p196, %p197
      %p199 = scmp.ne.s32.totalorder %s191, %s194
      %p200 = scmp.eq.s32.totalorder %s39, 0
      %p201 = por %p199, %p200
      %p202 = scmp.ne.s32.totalorder %s191, %s194
      %p203 = scmp.eq.s32.totalorder %s44, 3
      %p204 = por %p202, %p203
      %p205 = scmp.ne.s32.totalorder %s194, %s195
      %p206 = scmp.eq.s32.totalorder %s44, 0
      %p207 = por %p205, %p206
      %p208 = scmp.ne.s32.totalorder %s194, %s195
      %p209 = scmp.eq.s32.totalorder %s45, 3
      %p210 = por %p208, %p209
      %p212 = scmp.ne.s32.totalorder %s195, %s211
      %p213 = scmp.eq.s32.totalorder %s45, 0
      %p214 = por %p212, %p213
      %s215 = ssub.s32 %s47, %s54
      %p216 = scmp.eq.s32.totalorder %s215, 0
      %s218 = sadd.s32 %s217, 1
      %s219 = scalar_select %p216, %s217, %s218
      %p222 = pneg %p216
      %p223 = scmp.eq.s32.totalorder %s39, 3
      %p224 = por %p222, %p223
      %p225 = scmp.ne.s32.totalorder %s217, %s220
      %p226 = scmp.eq.s32.totalorder %s39, 0
      %p227 = por %p225, %p226
      %p228 = scmp.ne.s32.totalorder %s217, %s220
      %p229 = scmp.eq.s32.totalorder %s44, 3
      %p230 = por %p228, %p229
      %p231 = scmp.ne.s32.totalorder %s220, %s221
      %p232 = scmp.eq.s32.totalorder %s44, 0
      %p233 = por %p231, %p232
      %p234 = scmp.ne.s32.totalorder %s220, %s221
      %p235 = scmp.eq.s32.totalorder %s45, 3
      %p236 = por %p234, %p235
      %p238 = scmp.ne.s32.totalorder %s221, %s237
      %p239 = scmp.eq.s32.totalorder %s45, 0
      %p240 = por %p238, %p239
      %s241 = ssub.s32 %s47, %s54
      %p242 = scmp.eq.s32.totalorder %s241, 0
      %s244 = sadd.s32 %s243, 1
      %s245 = scalar_select %p242, %s243, %s244
      %p248 = pneg %p242
      %p249 = scmp.eq.s32.totalorder %s39, 3
      %p250 = por %p248, %p249
      %p251 = scmp.ne.s32.totalorder %s243, %s246
      %p252 = scmp.eq.s32.totalorder %s39, 0
      %p253 = por %p251, %p252
      %p254 = scmp.ne.s32.totalorder %s243, %s246
      %p255 = scmp.eq.s32.totalorder %s44, 3
      %p256 = por %p254, %p255
      %p257 = scmp.ne.s32.totalorder %s246, %s247
      %p258 = scmp.eq.s32.totalorder %s44, 0
      %p259 = por %p257, %p258
      %p260 = scmp.ne.s32.totalorder %s246, %s247
      %p261 = scmp.eq.s32.totalorder %s45, 3
      %p262 = por %p260, %p261
      %p264 = scmp.ne.s32.totalorder %s247, %s263
      %p265 = scmp.eq.s32.totalorder %s45, 0
      %p266 = por %p264, %p265
      %s267 = ssub.s32 %s47, %s54
      %p268 = scmp.eq.s32.totalorder %s267, 0
      %s270 = sadd.s32 %s269, 1
      %s271 = scalar_select %p268, %s269, %s270
      %p274 = pneg %p268
      %p275 = scmp.eq.s32.totalorder %s39, 3
      %p276 = por %p274, %p275
      %p277 = scmp.ne.s32.totalorder %s269, %s272
      %p278 = scmp.eq.s32.totalorder %s39, 0
      %p279 = por %p277, %p278
      %p280 = scmp.ne.s32.totalorder %s269, %s272
      %p281 = scmp.eq.s32.totalorder %s44, 3
      %p282 = por %p280, %p281
      %p283 = scmp.ne.s32.totalorder %s272, %s273
      %p284 = scmp.eq.s32.totalorder %s44, 0
      %p285 = por %p283, %p284
      %p286 = scmp.ne.s32.totalorder %s272, %s273
      %p287 = scmp.eq.s32.totalorder %s45, 3
      %p288 = por %p286, %p287
      %p290 = scmp.ne.s32.totalorder %s273, %s289
      %p291 = scmp.eq.s32.totalorder %s45, 0
      %p292 = por %p290, %p291
      %s293 = ssub.s32 %s47, %s54
      %p294 = scmp.eq.s32.totalorder %s293, 0
      %s296 = sadd.s32 %s295, 1
      %s297 = scalar_select %p294, %s295, %s296
      %p300 = pneg %p294
      %p301 = scmp.eq.s32.totalorder %s39, 3
      %p302 = por %p300, %p301
      %p303 = scmp.ne.s32.totalorder %s295, %s298
      %p304 = scmp.eq.s32.totalorder %s39, 0
      %p305 = por %p303, %p304
      %p306 = scmp.ne.s32.totalorder %s295, %s298
      %p307 = scmp.eq.s32.totalorder %s44, 3
      %p308 = por %p306, %p307
      %p309 = scmp.ne.s32.totalorder %s298, %s299
      %p310 = scmp.eq.s32.totalorder %s44, 0
      %p311 = por %p309, %p310
      %p312 = scmp.ne.s32.totalorder %s298, %s299
      %p313 = scmp.eq.s32.totalorder %s45, 3
      %p314 = por %p312, %p313
      %p316 = scmp.ne.s32.totalorder %s299, %s315
      %p317 = scmp.eq.s32.totalorder %s45, 0
      %p318 = por %p316, %p317
      %s319 = ssub.s32 %s47, %s54
      %p320 = scmp.eq.s32.totalorder %s319, 0
      %s322 = sadd.s32 %s321, 1
      %s323 = scalar_select %p320, %s321, %s322
      %p326 = pneg %p320
      %p327 = scmp.eq.s32.totalorder %s39, 3
      %p328 = por %p326, %p327
      %p329 = scmp.ne.s32.totalorder %s321, %s324
      %p330 = scmp.eq.s32.totalorder %s39, 0
      %p331 = por %p329, %p330
      %p332 = scmp.ne.s32.totalorder %s321, %s324
      %p333 = scmp.eq.s32.totalorder %s44, 3
      %p334 = por %p332, %p333
      %p335 = scmp.ne.s32.totalorder %s324, %s325
      %p336 = scmp.eq.s32.totalorder %s44, 0
      %p337 = por %p335, %p336
      %p338 = scmp.ne.s32.totalorder %s324, %s325
      %p339 = scmp.eq.s32.totalorder %s45, 3
      %p340 = por %p338, %p339
      %p342 = scmp.ne.s32.totalorder %s325, %s341
      %p343 = scmp.eq.s32.totalorder %s45, 0
      %p344 = por %p342, %p343
      %s345 = ssub.s32 %s47, %s54
      %p346 = scmp.eq.s32.totalorder %s345, 0
      %s348 = sadd.s32 %s347, 1
      %s349 = scalar_select %p346, %s347, %s348
      %p352 = pneg %p346
      %p353 = scmp.eq.s32.totalorder %s39, 3
      %p354 = por %p352, %p353
      %p355 = scmp.ne.s32.totalorder %s347, %s350
      %p356 = scmp.eq.s32.totalorder %s39, 0
      %p357 = por %p355, %p356
      %p358 = scmp.ne.s32.totalorder %s347, %s350
      %p359 = scmp.eq.s32.totalorder %s44, 3
      %p360 = por %p358, %p359
      %p361 = scmp.ne.s32.totalorder %s350, %s351
      %p362 = scmp.eq.s32.totalorder %s44, 0
      %p363 = por %p361, %p362
      %p364 = scmp.ne.s32.totalorder %s350, %s351
      %p365 = scmp.eq.s32.totalorder %s45, 3
      %p366 = por %p364, %p365
      %p368 = scmp.ne.s32.totalorder %s351, %s367
      %p369 = scmp.eq.s32.totalorder %s45, 0
      %p370 = por %p368, %p369
      %s371 = ssub.s32 %s47, %s54
      %p372 = scmp.eq.s32.totalorder %s371, 0
      %s374 = sadd.s32 %s373, 1
      %s375 = scalar_select %p372, %s373, %s374
      %p378 = pneg %p372
      %p379 = scmp.eq.s32.totalorder %s39, 3
      %p380 = por %p378, %p379
      %p381 = scmp.ne.s32.totalorder %s373, %s376
      %p382 = scmp.eq.s32.totalorder %s39, 0
      %p383 = por %p381, %p382
      %p384 = scmp.ne.s32.totalorder %s373, %s376
      %p385 = scmp.eq.s32.totalorder %s44, 3
      %p386 = por %p384, %p385
      %p387 = scmp.ne.s32.totalorder %s376, %s377
      %p388 = scmp.eq.s32.totalorder %s44, 0
      %p389 = por %p387, %p388
      %p390 = scmp.ne.s32.totalorder %s376, %s377
      %p391 = scmp.eq.s32.totalorder %s45, 3
      %p392 = por %p390, %p391
      %p394 = scmp.ne.s32.totalorder %s377, %s393
      %p395 = scmp.eq.s32.totalorder %s45, 0
      %p396 = por %p394, %p395
      %s397 = ssub.s32 %s47, %s54
      %p398 = scmp.eq.s32.totalorder %s397, 0
      %s400 = sadd.s32 %s399, 1
      %s401 = scalar_select %p398, %s399, %s400
      %p404 = pneg %p398
      %p405 = scmp.eq.s32.totalorder %s39, 3
      %p406 = por %p404, %p405
      %p407 = scmp.ne.s32.totalorder %s399, %s402
      %p408 = scmp.eq.s32.totalorder %s39, 0
      %p409 = por %p407, %p408
      %p410 = scmp.ne.s32.totalorder %s399, %s402
      %p411 = scmp.eq.s32.totalorder %s44, 3
      %p412 = por %p410, %p411
      %p413 = scmp.ne.s32.totalorder %s402, %s403
      %p414 = scmp.eq.s32.totalorder %s44, 0
      %p415 = por %p413, %p414
      %p416 = scmp.ne.s32.totalorder %s402, %s403
      %p417 = scmp.eq.s32.totalorder %s45, 3
      %p418 = por %p416, %p417
      %p420 = scmp.ne.s32.totalorder %s403, %s419
      %p421 = scmp.eq.s32.totalorder %s45, 0
      %p422 = por %p420, %p421
      %s423 = ssub.s32 %s46, %s58
      %p424 = scmp.eq.s32.totalorder %s423, 0
      %s426 = sadd.s32 %s425, 1
      %s427 = scalar_select %p424, %s425, %s426
      %p430 = pneg %p424
      %p431 = scmp.eq.s32.totalorder %s39, 3
      %p432 = por %p430, %p431
      %p433 = scmp.ne.s32.totalorder %s425, %s428
      %p434 = scmp.eq.s32.totalorder %s39, 0
      %p435 = por %p433, %p434
      %p436 = scmp.ne.s32.totalorder %s425, %s428
      %p437 = scmp.eq.s32.totalorder %s44, 3
      %p438 = por %p436, %p437
      %p439 = scmp.ne.s32.totalorder %s428, %s429
      %p440 = scmp.eq.s32.totalorder %s44, 0
      %p441 = por %p439, %p440
      %p442 = scmp.ne.s32.totalorder %s428, %s429
      %p443 = scmp.eq.s32.totalorder %s45, 3
      %p444 = por %p442, %p443
      %p446 = scmp.ne.s32.totalorder %s429, %s445
      %p447 = scmp.eq.s32.totalorder %s45, 0
      %p448 = por %p446, %p447
      %s449 = ssub.s32 %s46, %s58
      %p450 = scmp.eq.s32.totalorder %s449, 0
      %s452 = sadd.s32 %s451, 1
      %s453 = scalar_select %p450, %s451, %s452
      %p456 = pneg %p450
      %p457 = scmp.eq.s32.totalorder %s39, 3
      %p458 = por %p456, %p457
      %p459 = scmp.ne.s32.totalorder %s451, %s454
      %p460 = scmp.eq.s32.totalorder %s39, 0
      %p461 = por %p459, %p460
      %p462 = scmp.ne.s32.totalorder %s451, %s454
      %p463 = scmp.eq.s32.totalorder %s44, 3
      %p464 = por %p462, %p463
      %p465 = scmp.ne.s32.totalorder %s454, %s455
      %p466 = scmp.eq.s32.totalorder %s44, 0
      %p467 = por %p465, %p466
      %p468 = scmp.ne.s32.totalorder %s454, %s455
      %p469 = scmp.eq.s32.totalorder %s45, 3
      %p470 = por %p468, %p469
      %p472 = scmp.ne.s32.totalorder %s455, %s471
      %p473 = scmp.eq.s32.totalorder %s45, 0
      %p474 = por %p472, %p473
      %p475 = scmp.le.s32.totalorder 1, %s39
      %p476 = scmp.lt.s32.totalorder %s39, 5
      %p477 = pnand %p475, %p476
      %p478 = pneg %p477
      // Predicated region
      $region9: #{basic_module_forward.1} parent=5 // pred_check
        _
      $region10: #{basic_module_forward.1} parent=5 // pred_check_branch
        %480 = sbr.rel (%p477) target = $region12
      $region11: #{basic_module_forward.1} parent=5 // pred_region
        %s481 = ssub.s32 %s39, 1
        // Predicated region
        $region13: #{basic_module_forward.1} parent=11 // pred_check
          %p482 = pneg %p77
        $region14: #{basic_module_forward.1} parent=11 // pred_check_branch
          %484 = sbr.rel (%p482) target = $region16
        $region15: #{basic_module_forward.1} parent=11 // pred_region
          %s486 = ssub.s32 256, 256
          %487 = vsyncadd [#allocation4], %s486
          %s488 = smul.addr %s48, 2
          %s489 = smul.addr %s488, 128
          %s490 = scalar_lea.hbm %s0, %s489
          %s492 = sshll.u32 [#allocation3], 4
          %s493 = int_to_ptr.vmem [resolvable:$true] %s492
          %495 = dma.hbm_to_vmem [thread:$0]  %s490, 256, %s493, [#allocation4]
        $region16: #{basic_module_forward.1} parent=11 // pred_fallthru
          _
      $region12: #{basic_module_forward.1} parent=5 // pred_fallthru
        _
      %p496 = scmp.lt.s32.totalorder %s39, 4
      // Predicated region
      $region17: #{basic_module_forward.1} parent=5 // pred_check
        %p497 = pneg %p496
      $region18: #{basic_module_forward.1} parent=5 // pred_check_branch
        %499 = sbr.rel (%p497) target = $region20
      $region19: #{basic_module_forward.1} parent=5 // pred_region
        // Predicated region
        $region21: #{basic_module_forward.1} parent=19 // pred_check
          %p500 = pneg %p97
        $region22: #{basic_module_forward.1} parent=19 // pred_check_branch
          %502 = sbr.rel (%p500) target = $region24
        $region23: #{basic_module_forward.1} parent=19 // pred_region
          %p503 = scmp.lt.s32.totalorder %s47, 3
          %s504 = scalar_select %p503, %s47, 3
          %s505 = smul.addr %s504, 2
          %s506 = scalar_lea.vmem %s1, %s505
        $region24: #{basic_module_forward.1} parent=19 // pred_fallthru
          _
        // Predicated region
        $region25: #{basic_module_forward.1} parent=19 // pred_check
          %p507 = pneg %p123
        $region26: #{basic_module_forward.1} parent=19 // pred_check_branch
          %509 = sbr.rel (%p507) target = $region28
        $region27: #{basic_module_forward.1} parent=19 // pred_region
          %s510 = sand.u32 %s39, 1
          %s511 = scalar_lea.sflag [#allocation7], %s510
          %s512 = sand.u32 %s113, 1
          %s513 = smul.addr %s512, 64
          %s514 = scalar_lea.vmem [#allocation6], %s513
          %s516 = ssub.s32 1024, 1024
          %517 = vsyncadd %s511, %s516
          %s518 = smul.addr %s47, 8
          %s519 = smul.addr %s518, 128
          %s520 = scalar_lea.hbm %s2, %s519
          %s521 = sshll.u32 %s514, 4
          %s522 = int_to_ptr.vmem [resolvable:$true] %s521
          %527 = dma.hbm_to_vmem [thread:$0]  %s520, 1024, %s522, %s511, 256, 256, 16
        $region28: #{basic_module_forward.1} parent=19 // pred_fallthru
          _
        // Predicated region
        $region29: #{basic_module_forward.1} parent=19 // pred_check
          %p528 = pneg %p149
        $region30: #{basic_module_forward.1} parent=19 // pred_check_branch
          %530 = sbr.rel (%p528) target = $region32
        $region31: #{basic_module_forward.1} parent=19 // pred_region
          %p531 = scmp.lt.s32.totalorder %s47, 3
          %s532 = scalar_select %p531, %s47, 3
          %s533 = smul.addr %s532, 2
          %s534 = scalar_lea.vmem %s3, %s533
        $region32: #{basic_module_forward.1} parent=19 // pred_fallthru
          _
        // Predicated region
        $region33: #{basic_module_forward.1} parent=19 // pred_check
          %p535 = pneg %p175
        $region34: #{basic_module_forward.1} parent=19 // pred_check_branch
          %537 = sbr.rel (%p535) target = $region36
        $region35: #{basic_module_forward.1} parent=19 // pred_region
          %s538 = sand.u32 %s39, 1
          %s539 = scalar_lea.sflag [#allocation7], %s538
          %s540 = sand.u32 %s165, 1
          %s541 = smul.addr %s540, 2
          %s542 = scalar_lea.vmem [#allocation8], %s541
          %s544 = ssub.s32 32, 32
          %545 = vsyncadd %s539, %s544
          %s546 = smul.addr %s47, 2
          %s547 = smul.addr %s546, 16
          %s548 = scalar_lea.hbm %s4, %s547
          %s550 = sshll.u32 %s542, 4
          %s551 = int_to_ptr.vmem [resolvable:$true] %s550
          %553 = dma.hbm_to_vmem [thread:$0]  %s548, 32, %s551, %s539
        $region36: #{basic_module_forward.1} parent=19 // pred_fallthru
          _
        // Predicated region
        $region37: #{basic_module_forward.1} parent=19 // pred_check
          %p554 = pneg %p201
        $region38: #{basic_module_forward.1} parent=19 // pred_check_branch
          %556 = sbr.rel (%p554) target = $region40
        $region39: #{basic_module_forward.1} parent=19 // pred_region
          %s557 = sand.u32 %s39, 1
          %s558 = scalar_lea.sflag [#allocation10], %s557
          %s559 = sand.u32 %s191, 1
          %s560 = smul.addr %s559, 128
          %s561 = scalar_lea.vmem [#allocation9], %s560
          %s563 = ssub.s32 2048, 2048
          %564 = vsyncadd %s558, %s563
          %s565 = smul.addr %s47, 16
          %s566 = smul.addr %s565, 128
          %s567 = scalar_lea.hbm %s5, %s566
          %s568 = sshll.u32 %s561, 4
          %s569 = int_to_ptr.vmem [resolvable:$true] %s568
          %574 = dma.hbm_to_vmem [thread:$0]  %s567, 2048, %s569, %s558, 256, 256, 16
        $region40: #{basic_module_forward.1} parent=19 // pred_fallthru
          _
        // Predicated region
        $region41: #{basic_module_forward.1} parent=19 // pred_check
          %p575 = pneg %p227
        $region42: #{basic_module_forward.1} parent=19 // pred_check_branch
          %577 = sbr.rel (%p575) target = $region44
        $region43: #{basic_module_forward.1} parent=19 // pred_region
          %p578 = scmp.lt.s32.totalorder %s47, 3
          %s579 = scalar_select %p578, %s47, 3
          %s580 = smul.addr %s579, 2
          %s581 = scalar_lea.vmem %s6, %s580
        $region44: #{basic_module_forward.1} parent=19 // pred_fallthru
          _
        // Predicated region
        $region45: #{basic_module_forward.1} parent=19 // pred_check
          %p582 = pneg %p253
        $region46: #{basic_module_forward.1} parent=19 // pred_check_branch
          %584 = sbr.rel (%p582) target = $region48
        $region47: #{basic_module_forward.1} parent=19 // pred_region
          %s585 = sand.u32 %s39, 1
          %s586 = scalar_lea.sflag [#allocation10], %s585
          %s587 = sand.u32 %s243, 1
          %s588 = smul.addr %s587, 2
          %s589 = scalar_lea.vmem [#allocation11], %s588
          %s591 = ssub.s32 32, 32
          %592 = vsyncadd %s586, %s591
          %s593 = smul.addr %s47, 2
          %s594 = smul.addr %s593, 16
          %s595 = scalar_lea.hbm %s7, %s594
          %s597 = sshll.u32 %s589, 4
          %s598 = int_to_ptr.vmem [resolvable:$true] %s597
          %600 = dma.hbm_to_vmem [thread:$0]  %s595, 32, %s598, %s586
        $region48: #{basic_module_forward.1} parent=19 // pred_fallthru
          _
        // Predicated region
        $region49: #{basic_module_forward.1} parent=19 // pred_check
          %p601 = pneg %p279
        $region50: #{basic_module_forward.1} parent=19 // pred_check_branch
          %603 = sbr.rel (%p601) target = $region52
        $region51: #{basic_module_forward.1} parent=19 // pred_region
          %s604 = sand.u32 %s39, 1
          %s605 = scalar_lea.sflag [#allocation13], %s604
          %s606 = sand.u32 %s269, 1
          %s607 = smul.addr %s606, 64
          %s608 = scalar_lea.vmem [#allocation12], %s607
          %s610 = ssub.s32 1024, 1024
          %611 = vsyncadd %s605, %s610
          %s612 = smul.addr %s47, 8
          %s613 = smul.addr %s612, 128
          %s614 = scalar_lea.hbm %s8, %s613
          %s615 = sshll.u32 %s608, 4
          %s616 = int_to_ptr.vmem [resolvable:$true] %s615
          %621 = dma.hbm_to_vmem [thread:$0]  %s614, 1024, %s616, %s605, 256, 256, 16
        $region52: #{basic_module_forward.1} parent=19 // pred_fallthru
          _
        // Predicated region
        $region53: #{basic_module_forward.1} parent=19 // pred_check
          %p622 = pneg %p305
        $region54: #{basic_module_forward.1} parent=19 // pred_check_branch
          %624 = sbr.rel (%p622) target = $region56
        $region55: #{basic_module_forward.1} parent=19 // pred_region
          %s625 = sand.u32 %s39, 1
          %s626 = scalar_lea.sflag [#allocation13], %s625
          %s627 = sand.u32 %s295, 1
          %s628 = smul.addr %s627, 2
          %s629 = scalar_lea.vmem [#allocation14], %s628
          %s631 = ssub.s32 32, 32
          %632 = vsyncadd %s626, %s631
          %s633 = smul.addr %s47, 2
          %s634 = smul.addr %s633, 16
          %s635 = scalar_lea.hbm %s9, %s634
          %s637 = sshll.u32 %s629, 4
          %s638 = int_to_ptr.vmem [resolvable:$true] %s637
          %640 = dma.hbm_to_vmem [thread:$0]  %s635, 32, %s638, %s626
        $region56: #{basic_module_forward.1} parent=19 // pred_fallthru
          _
        // Predicated region
        $region57: #{basic_module_forward.1} parent=19 // pred_check
          %p641 = pneg %p331
        $region58: #{basic_module_forward.1} parent=19 // pred_check_branch
          %643 = sbr.rel (%p641) target = $region60
        $region59: #{basic_module_forward.1} parent=19 // pred_region
          %s644 = sand.u32 %s39, 1
          %s645 = scalar_lea.sflag [#allocation16], %s644
          %s646 = sand.u32 %s321, 1
          %s647 = smul.addr %s646, 2
          %s648 = scalar_lea.vmem [#allocation15], %s647
          %s650 = ssub.s32 32, 32
          %651 = vsyncadd %s645, %s650
          %s652 = smul.addr %s47, 2
          %s653 = smul.addr %s652, 16
          %s654 = scalar_lea.hbm %s10, %s653
          %s656 = sshll.u32 %s648, 4
          %s657 = int_to_ptr.vmem [resolvable:$true] %s656
          %659 = dma.hbm_to_vmem [thread:$0]  %s654, 32, %s657, %s645
        $region60: #{basic_module_forward.1} parent=19 // pred_fallthru
          _
        // Predicated region
        $region61: #{basic_module_forward.1} parent=19 // pred_check
          %p660 = pneg %p357
        $region62: #{basic_module_forward.1} parent=19 // pred_check_branch
          %662 = sbr.rel (%p660) target = $region64
        $region63: #{basic_module_forward.1} parent=19 // pred_region
          %s663 = sand.u32 %s39, 1
          %s664 = scalar_lea.sflag [#allocation16], %s663
          %s665 = sand.u32 %s347, 1
          %s666 = smul.addr %s665, 128
          %s667 = scalar_lea.vmem [#allocation17], %s666
          %s669 = ssub.s32 2048, 2048
          %670 = vsyncadd %s664, %s669
          %s671 = smul.addr %s47, 16
          %s672 = smul.addr %s671, 128
          %s673 = scalar_lea.hbm %s11, %s672
          %s674 = sshll.u32 %s667, 4
          %s675 = int_to_ptr.vmem [resolvable:$true] %s674
          %680 = dma.hbm_to_vmem [thread:$0]  %s673, 2048, %s675, %s664, 256, 256, 16
        $region64: #{basic_module_forward.1} parent=19 // pred_fallthru
          _
        // Predicated region
        $region65: #{basic_module_forward.1} parent=19 // pred_check
          %p681 = pneg %p383
        $region66: #{basic_module_forward.1} parent=19 // pred_check_branch
          %683 = sbr.rel (%p681) target = $region68
        $region67: #{basic_module_forward.1} parent=19 // pred_region
          %s684 = sand.u32 %s39, 1
          %s685 = scalar_lea.sflag [#allocation19], %s684
          %s686 = sand.u32 %s373, 1
          %s687 = smul.addr %s686, 2
          %s688 = scalar_lea.vmem [#allocation18], %s687
          %s690 = ssub.s32 32, 32
          %691 = vsyncadd %s685, %s690
          %s692 = smul.addr %s47, 2
          %s693 = smul.addr %s692, 16
          %s694 = scalar_lea.hbm %s12, %s693
          %s696 = sshll.u32 %s688, 4
          %s697 = int_to_ptr.vmem [resolvable:$true] %s696
          %699 = dma.hbm_to_vmem [thread:$0]  %s694, 32, %s697, %s685
        $region68: #{basic_module_forward.1} parent=19 // pred_fallthru
          _
        // Predicated region
        $region69: #{basic_module_forward.1} parent=19 // pred_check
          %p700 = pneg %p409
        $region70: #{basic_module_forward.1} parent=19 // pred_check_branch
          %702 = sbr.rel (%p700) target = $region72
        $region71: #{basic_module_forward.1} parent=19 // pred_region
          %s703 = sand.u32 %s39, 1
          %s704 = scalar_lea.sflag [#allocation19], %s703
          %s705 = sand.u32 %s399, 1
          %s706 = smul.addr %s705, 2
          %s707 = scalar_lea.vmem [#allocation20], %s706
          %s709 = ssub.s32 32, 32
          %710 = vsyncadd %s704, %s709
          %s711 = smul.addr %s47, 2
          %s712 = smul.addr %s711, 16
          %s713 = scalar_lea.hbm %s13, %s712
          %s715 = sshll.u32 %s707, 4
          %s716 = int_to_ptr.vmem [resolvable:$true] %s715
          %718 = dma.hbm_to_vmem [thread:$0]  %s713, 32, %s716, %s704
        $region72: #{basic_module_forward.1} parent=19 // pred_fallthru
          _
      $region20: #{basic_module_forward.1} parent=5 // pred_fallthru
        _
      %p719 = scmp.le.s32.totalorder 1, %s39
      %p720 = scmp.lt.s32.totalorder %s39, 5
      %p721 = pnand %p719, %p720
      %p722 = pneg %p721
      // Predicated region
      $region73: #{basic_module_forward.1} parent=5 // pred_check
        _
      $region74: #{basic_module_forward.1} parent=5 // pred_check_branch
        %724 = sbr.rel (%p721) target = $region76
      $region75: #{basic_module_forward.1} parent=5 // pred_region
        %s725 = ssub.s32 %s39, 1
        // Predicated region
        $region77: #{basic_module_forward.1} parent=75 // pred_check
          %p726 = pneg %p77
        $region78: #{basic_module_forward.1} parent=75 // pred_check_branch
          %728 = sbr.rel (%p726) target = $region80
        $region79: #{basic_module_forward.1} parent=75 // pred_region
          %729 = dma.done [#allocation4], 256
        $region80: #{basic_module_forward.1} parent=75 // pred_fallthru
          _
        %s730 = sand.u32 %s44, 1
        %s731 = scalar_lea.sflag [#allocation7], %s730
        %s732 = sand.u32 %s116, 1
        %s733 = smul.addr %s732, 64
        %s734 = scalar_lea.vmem [#allocation6], %s733
        // Predicated region
        $region81: #{basic_module_forward.1} parent=75 // pred_check
          %p735 = pneg %p129
        $region82: #{basic_module_forward.1} parent=75 // pred_check_branch
          %737 = sbr.rel (%p735) target = $region84
        $region83: #{basic_module_forward.1} parent=75 // pred_region
          %738 = dma.done %s731, 1024
        $region84: #{basic_module_forward.1} parent=75 // pred_fallthru
          _
        %s739 = sand.u32 %s44, 1
        %s740 = scalar_lea.sflag [#allocation7], %s739
        %s741 = sand.u32 %s168, 1
        %s742 = smul.addr %s741, 2
        %s743 = scalar_lea.vmem [#allocation8], %s742
        // Predicated region
        $region85: #{basic_module_forward.1} parent=75 // pred_check
          %p744 = pneg %p181
        $region86: #{basic_module_forward.1} parent=75 // pred_check_branch
          %746 = sbr.rel (%p744) target = $region88
        $region87: #{basic_module_forward.1} parent=75 // pred_region
          %747 = dma.done %s740, 32
        $region88: #{basic_module_forward.1} parent=75 // pred_fallthru
          _
        %s748 = sand.u32 %s44, 1
        %s749 = scalar_lea.sflag [#allocation10], %s748
        %s750 = sand.u32 %s194, 1
        %s751 = smul.addr %s750, 128
        %s752 = scalar_lea.vmem [#allocation9], %s751
        // Predicated region
        $region89: #{basic_module_forward.1} parent=75 // pred_check
          %p753 = pneg %p207
        $region90: #{basic_module_forward.1} parent=75 // pred_check_branch
          %755 = sbr.rel (%p753) target = $region92
        $region91: #{basic_module_forward.1} parent=75 // pred_region
          %756 = dma.done %s749, 2048
        $region92: #{basic_module_forward.1} parent=75 // pred_fallthru
          _
        %s757 = sand.u32 %s44, 1
        %s758 = scalar_lea.sflag [#allocation10], %s757
        %s759 = sand.u32 %s246, 1
        %s760 = smul.addr %s759, 2
        %s761 = scalar_lea.vmem [#allocation11], %s760
        // Predicated region
        $region93: #{basic_module_forward.1} parent=75 // pred_check
          %p762 = pneg %p259
        $region94: #{basic_module_forward.1} parent=75 // pred_check_branch
          %764 = sbr.rel (%p762) target = $region96
        $region95: #{basic_module_forward.1} parent=75 // pred_region
          %765 = dma.done %s758, 32
        $region96: #{basic_module_forward.1} parent=75 // pred_fallthru
          _
        %s766 = sand.u32 %s44, 1
        %s767 = scalar_lea.sflag [#allocation13], %s766
        %s768 = sand.u32 %s272, 1
        %s769 = smul.addr %s768, 64
        %s770 = scalar_lea.vmem [#allocation12], %s769
        // Predicated region
        $region97: #{basic_module_forward.1} parent=75 // pred_check
          %p771 = pneg %p285
        $region98: #{basic_module_forward.1} parent=75 // pred_check_branch
          %773 = sbr.rel (%p771) target = $region100
        $region99: #{basic_module_forward.1} parent=75 // pred_region
          %774 = dma.done %s767, 1024
        $region100: #{basic_module_forward.1} parent=75 // pred_fallthru
          _
        %s775 = sand.u32 %s44, 1
        %s776 = scalar_lea.sflag [#allocation13], %s775
        %s777 = sand.u32 %s298, 1
        %s778 = smul.addr %s777, 2
        %s779 = scalar_lea.vmem [#allocation14], %s778
        // Predicated region
        $region101: #{basic_module_forward.1} parent=75 // pred_check
          %p780 = pneg %p311
        $region102: #{basic_module_forward.1} parent=75 // pred_check_branch
          %782 = sbr.rel (%p780) target = $region104
        $region103: #{basic_module_forward.1} parent=75 // pred_region
          %783 = dma.done %s776, 32
        $region104: #{basic_module_forward.1} parent=75 // pred_fallthru
          _
        %s784 = sand.u32 %s44, 1
        %s785 = scalar_lea.sflag [#allocation16], %s784
        %s786 = sand.u32 %s324, 1
        %s787 = smul.addr %s786, 2
        %s788 = scalar_lea.vmem [#allocation15], %s787
        // Predicated region
        $region105: #{basic_module_forward.1} parent=75 // pred_check
          %p789 = pneg %p337
        $region106: #{basic_module_forward.1} parent=75 // pred_check_branch
          %791 = sbr.rel (%p789) target = $region108
        $region107: #{basic_module_forward.1} parent=75 // pred_region
          %792 = dma.done %s785, 32
        $region108: #{basic_module_forward.1} parent=75 // pred_fallthru
          _
        %s793 = sand.u32 %s44, 1
        %s794 = scalar_lea.sflag [#allocation16], %s793
        %s795 = sand.u32 %s350, 1
        %s796 = smul.addr %s795, 128
        %s797 = scalar_lea.vmem [#allocation17], %s796
        // Predicated region
        $region109: #{basic_module_forward.1} parent=75 // pred_check
          %p798 = pneg %p363
        $region110: #{basic_module_forward.1} parent=75 // pred_check_branch
          %800 = sbr.rel (%p798) target = $region112
        $region111: #{basic_module_forward.1} parent=75 // pred_region
          %801 = dma.done %s794, 2048
        $region112: #{basic_module_forward.1} parent=75 // pred_fallthru
          _
        %s802 = sand.u32 %s44, 1
        %s803 = scalar_lea.sflag [#allocation19], %s802
        %s804 = sand.u32 %s376, 1
        %s805 = smul.addr %s804, 2
        %s806 = scalar_lea.vmem [#allocation18], %s805
        // Predicated region
        $region113: #{basic_module_forward.1} parent=75 // pred_check
          %p807 = pneg %p389
        $region114: #{basic_module_forward.1} parent=75 // pred_check_branch
          %809 = sbr.rel (%p807) target = $region116
        $region115: #{basic_module_forward.1} parent=75 // pred_region
          %810 = dma.done %s803, 32
        $region116: #{basic_module_forward.1} parent=75 // pred_fallthru
          _
        %s811 = sand.u32 %s44, 1
        %s812 = scalar_lea.sflag [#allocation19], %s811
        %s813 = sand.u32 %s402, 1
        %s814 = smul.addr %s813, 2
        %s815 = scalar_lea.vmem [#allocation20], %s814
        // Predicated region
        $region117: #{basic_module_forward.1} parent=75 // pred_check
          %p816 = pneg %p415
        $region118: #{basic_module_forward.1} parent=75 // pred_check_branch
          %818 = sbr.rel (%p816) target = $region120
        $region119: #{basic_module_forward.1} parent=75 // pred_region
          %819 = dma.done %s812, 32
        $region120: #{basic_module_forward.1} parent=75 // pred_fallthru
          _
        %p820 = pneg %p77
        %p821 = pneg %p74
        %p822 = scmp.lt.s32.totalorder %s49, 3
        %s823 = scalar_select %p822, %s49, 3
        %s824 = smul.addr %s823, 2
        %s825 = scalar_lea.vmem %s1, %s824
        %p826 = pneg %p103
        %p827 = pneg %p100
        %s828 = sand.u32 %s44, 1
        %s829 = scalar_lea.sflag [#allocation7], %s828
        %s830 = sand.u32 %s116, 1
        %s831 = smul.addr %s830, 64
        %s832 = scalar_lea.vmem [#allocation6], %s831
        %p833 = pneg %p129
        %p834 = pneg %p126
        %p835 = scmp.lt.s32.totalorder %s49, 3
        %s836 = scalar_select %p835, %s49, 3
        %s837 = smul.addr %s836, 2
        %s838 = scalar_lea.vmem %s3, %s837
        %p839 = pneg %p155
        %p840 = pneg %p152
        %s841 = sand.u32 %s44, 1
        %s842 = scalar_lea.sflag [#allocation7], %s841
        %s843 = sand.u32 %s168, 1
        %s844 = smul.addr %s843, 2
        %s845 = scalar_lea.vmem [#allocation8], %s844
        %p846 = pneg %p181
        %p847 = pneg %p178
        %s848 = sand.u32 %s44, 1
        %s849 = scalar_lea.sflag [#allocation10], %s848
        %s850 = sand.u32 %s194, 1
        %s851 = smul.addr %s850, 128
        %s852 = scalar_lea.vmem [#allocation9], %s851
        %p853 = pneg %p207
        %p854 = pneg %p204
        %p855 = scmp.lt.s32.totalorder %s49, 3
        %s856 = scalar_select %p855, %s49, 3
        %s857 = smul.addr %s856, 2
        %s858 = scalar_lea.vmem %s6, %s857
        %p859 = pneg %p233
        %p860 = pneg %p230
        %s861 = sand.u32 %s44, 1
        %s862 = scalar_lea.sflag [#allocation10], %s861
        %s863 = sand.u32 %s246, 1
        %s864 = smul.addr %s863, 2
        %s865 = scalar_lea.vmem [#allocation11], %s864
        %p866 = pneg %p259
        %p867 = pneg %p256
        %s868 = sand.u32 %s44, 1
        %s869 = scalar_lea.sflag [#allocation13], %s868
        %s870 = sand.u32 %s272, 1
        %s871 = smul.addr %s870, 64
        %s872 = scalar_lea.vmem [#allocation12], %s871
        %p873 = pneg %p285
        %p874 = pneg %p282
        %s875 = sand.u32 %s44, 1
        %s876 = scalar_lea.sflag [#allocation13], %s875
        %s877 = sand.u32 %s298, 1
        %s878 = smul.addr %s877, 2
        %s879 = scalar_lea.vmem [#allocation14], %s878
        %p880 = pneg %p311
        %p881 = pneg %p308
        %s882 = sand.u32 %s44, 1
        %s883 = scalar_lea.sflag [#allocation16], %s882
        %s884 = sand.u32 %s324, 1
        %s885 = smul.addr %s884, 2
        %s886 = scalar_lea.vmem [#allocation15], %s885
        %p887 = pneg %p337
        %p888 = pneg %p334
        %s889 = sand.u32 %s44, 1
        %s890 = scalar_lea.sflag [#allocation16], %s889
        %s891 = sand.u32 %s350, 1
        %s892 = smul.addr %s891, 128
        %s893 = scalar_lea.vmem [#allocation17], %s892
        %p894 = pneg %p363
        %p895 = pneg %p360
        %s896 = sand.u32 %s44, 1
        %s897 = scalar_lea.sflag [#allocation19], %s896
        %s898 = sand.u32 %s376, 1
        %s899 = smul.addr %s898, 2
        %s900 = scalar_lea.vmem [#allocation18], %s899
        %p901 = pneg %p389
        %p902 = pneg %p386
        %s903 = sand.u32 %s44, 1
        %s904 = scalar_lea.sflag [#allocation19], %s903
        %s905 = sand.u32 %s402, 1
        %s906 = smul.addr %s905, 2
        %s907 = scalar_lea.vmem [#allocation20], %s906
        %p908 = pneg %p415
        %p909 = pneg %p412
        %p910 = pneg %p441
        %p911 = pneg %p438
        %p912 = pneg %p467
        %p913 = pneg %p464
        %p914 = scmp.lt.s32.totalorder %s48, 0
        %s915 = scalar_select %p914, %s48, 0
        %s916 = smul.addr %s915, 8
        %s917 = scalar_lea.vmem %s15, %s916
        %p918 = scmp.lt.s32.totalorder %s49, 3
        %s919 = scalar_select %p918, %s49, 3
        %s920 = smul.addr %s919, 2
        %s921 = scalar_lea.vmem %s1, %s920
        %p922 = scmp.lt.s32.totalorder %s49, 3
        %s923 = scalar_select %p922, %s49, 3
        %s924 = smul.addr %s923, 2
        %s925 = scalar_lea.vmem %s3, %s924
        %p926 = scmp.lt.s32.totalorder %s49, 3
        %s927 = scalar_select %p926, %s49, 3
        %s928 = smul.addr %s927, 2
        %s929 = scalar_lea.vmem %s6, %s928
        %p930 = scmp.lt.s32.totalorder %s48, 0
        %s931 = scalar_select %p930, %s48, 0
        %s932 = smul.addr %s931, 8
        %s933 = scalar_lea.vmem %s15, %s932
        %p935 = scmp.eq.s32.totalorder %s49, 0
        // Predicated region
        $region121: #{basic_module_forward.1} parent=75 // pred_check
          %p936 = pneg %p935
        $region122: #{basic_module_forward.1} parent=75 // pred_check_branch
          %938 = sbr.rel (%p936) target = $region124
        $region123: #{basic_module_forward.1} parent=75 // pred_region
          %v939 = vld [vmem:[#allocation3] sm:$0xff]
          %v940 = vld [vmem:[#allocation3 + $0x8] sm:$0xff]
          %941 = vst [vmem:[#allocation21] sm:$0xff] %v939
          %942 = vst [vmem:[#allocation21 + $0x8] sm:$0xff] %v940
          %vm943 = vcmask 7168
          %944 = vst.msk [vmem:[%s933] sm:$0xff] %vm943, 0.0
        $region124: #{basic_module_forward.1} parent=75 // pred_fallthru
          _
        %v945 = vld [vmem:[#allocation21] sm:$0xff]
        %v946 = vld [vmem:[#allocation21 + $0x8] sm:$0xff]
        %v947 = vpack.c.bf16 %v945, %v945
        %v948 = vpack.c.bf16 %v946, %v946
        %v949 = vld [vmem:[%s921] sm:$0x3]
        %v950 = vlaneseq
        %v951 = vshrl.u32 %v950, 7
        %v952 = vadd.s32 %v951, 8
        %v953 = vadd.s32 %v951, 16
        %v954 = vadd.s32 %v951, 24
        %v955 = vadd.s32 %v951, 32
        %v956 = vadd.s32 %v951, 40
        %v957 = vadd.s32 %v951, 48
        %v958 = vadd.s32 %v951, 56
        %v959 = vadd.s32 %v951, 64
        %v960 = vadd.s32 %v951, 72
        %v961 = vadd.s32 %v951, 80
        %v962 = vadd.s32 %v951, 88
        %v963 = vadd.s32 %v951, 96
        %v964 = vadd.s32 %v951, 104
        %v965 = vadd.s32 %v951, 112
        %v966 = vadd.s32 %v951, 120
        %v967 = vadd.s32 %v951, 128
        %v968 = vadd.s32 %v951, 136
        %v969 = vadd.s32 %v951, 144
        %v970 = vadd.s32 %v951, 152
        %v971 = vadd.s32 %v951, 160
        %v972 = vadd.s32 %v951, 168
        %v973 = vadd.s32 %v951, 176
        %v974 = vadd.s32 %v951, 184
        %v975 = vadd.s32 %v951, 192
        %v976 = vadd.s32 %v951, 200
        %v977 = vadd.s32 %v951, 208
        %v978 = vadd.s32 %v951, 216
        %v979 = vadd.s32 %v951, 224
        %v980 = vadd.s32 %v951, 232
        %v981 = vadd.s32 %v951, 240
        %v982 = vadd.s32 %v951, 248
        %v983 = vlaneseq
        %v984 = vshrl.u32 %v983, 7
        %v985 = vsub.s32 0, %v984
        %v986 = vrot.slane %v949, %v985
        %v987 = vlaneseq
        %v988 = vshrl.u32 %v987, 7
        %v989 = vsub.s32 1, %v988
        %v990 = vrot.slane %v949, %v989
        %vm991 = vcmp.eq.s32.totalorder %v951, %v986
        %vm992 = vcmp.eq.s32.totalorder %v951, %v990
        %vm993 = vcmp.eq.s32.totalorder %v952, %v986
        %vm994 = vcmp.eq.s32.totalorder %v952, %v990
        %vm995 = vcmp.eq.s32.totalorder %v953, %v986
        %vm996 = vcmp.eq.s32.totalorder %v953, %v990
        %vm997 = vcmp.eq.s32.totalorder %v954, %v986
        %vm998 = vcmp.eq.s32.totalorder %v954, %v990
        %vm999 = vcmp.eq.s32.totalorder %v955, %v986
        %vm1000 = vcmp.eq.s32.totalorder %v955, %v990
        %vm1001 = vcmp.eq.s32.totalorder %v956, %v986
        %vm1002 = vcmp.eq.s32.totalorder %v956, %v990
        %vm1003 = vcmp.eq.s32.totalorder %v957, %v986
        %vm1004 = vcmp.eq.s32.totalorder %v957, %v990
        %vm1005 = vcmp.eq.s32.totalorder %v958, %v986
        %vm1006 = vcmp.eq.s32.totalorder %v958, %v990
        %vm1007 = vcmp.eq.s32.totalorder %v959, %v986
        %vm1008 = vcmp.eq.s32.totalorder %v959, %v990
        %vm1009 = vcmp.eq.s32.totalorder %v960, %v986
        %vm1010 = vcmp.eq.s32.totalorder %v960, %v990
        %vm1011 = vcmp.eq.s32.totalorder %v961, %v986
        %vm1012 = vcmp.eq.s32.totalorder %v961, %v990
        %vm1013 = vcmp.eq.s32.totalorder %v962, %v986
        %vm1014 = vcmp.eq.s32.totalorder %v962, %v990
        %vm1015 = vcmp.eq.s32.totalorder %v963, %v986
        %vm1016 = vcmp.eq.s32.totalorder %v963, %v990
        %vm1017 = vcmp.eq.s32.totalorder %v964, %v986
        %vm1018 = vcmp.eq.s32.totalorder %v964, %v990
        %vm1019 = vcmp.eq.s32.totalorder %v965, %v986
        %vm1020 = vcmp.eq.s32.totalorder %v965, %v990
        %vm1021 = vcmp.eq.s32.totalorder %v966, %v986
        %vm1022 = vcmp.eq.s32.totalorder %v966, %v990
        %vm1023 = vcmp.eq.s32.totalorder %v967, %v986
        %vm1024 = vcmp.eq.s32.totalorder %v967, %v990
        %vm1025 = vcmp.eq.s32.totalorder %v968, %v986
        %vm1026 = vcmp.eq.s32.totalorder %v968, %v990
        %vm1027 = vcmp.eq.s32.totalorder %v969, %v986
        %vm1028 = vcmp.eq.s32.totalorder %v969, %v990
        %vm1029 = vcmp.eq.s32.totalorder %v970, %v986
        %vm1030 = vcmp.eq.s32.totalorder %v970, %v990
        %vm1031 = vcmp.eq.s32.totalorder %v971, %v986
        %vm1032 = vcmp.eq.s32.totalorder %v971, %v990
        %vm1033 = vcmp.eq.s32.totalorder %v972, %v986
        %vm1034 = vcmp.eq.s32.totalorder %v972, %v990
        %vm1035 = vcmp.eq.s32.totalorder %v973, %v986
        %vm1036 = vcmp.eq.s32.totalorder %v973, %v990
        %vm1037 = vcmp.eq.s32.totalorder %v974, %v986
        %vm1038 = vcmp.eq.s32.totalorder %v974, %v990
        %vm1039 = vcmp.eq.s32.totalorder %v975, %v986
        %vm1040 = vcmp.eq.s32.totalorder %v975, %v990
        %vm1041 = vcmp.eq.s32.totalorder %v976, %v986
        %vm1042 = vcmp.eq.s32.totalorder %v976, %v990
        %vm1043 = vcmp.eq.s32.totalorder %v977, %v986
        %vm1044 = vcmp.eq.s32.totalorder %v977, %v990
        %vm1045 = vcmp.eq.s32.totalorder %v978, %v986
        %vm1046 = vcmp.eq.s32.totalorder %v978, %v990
        %vm1047 = vcmp.eq.s32.totalorder %v979, %v986
        %vm1048 = vcmp.eq.s32.totalorder %v979, %v990
        %vm1049 = vcmp.eq.s32.totalorder %v980, %v986
        %vm1050 = vcmp.eq.s32.totalorder %v980, %v990
        %vm1051 = vcmp.eq.s32.totalorder %v981, %v986
        %vm1052 = vcmp.eq.s32.totalorder %v981, %v990
        %vm1053 = vcmp.eq.s32.totalorder %v982, %v986
        %vm1054 = vcmp.eq.s32.totalorder %v982, %v990
        %v1055 = vsel %vm991, 1, 0
        %v1056 = vsel %vm992, 1, 0
        %v1057 = vsel %vm993, 1, 0
        %v1058 = vsel %vm994, 1, 0
        %v1059 = vsel %vm995, 1, 0
        %v1060 = vsel %vm996, 1, 0
        %v1061 = vsel %vm997, 1, 0
        %v1062 = vsel %vm998, 1, 0
        %v1063 = vsel %vm999, 1, 0
        %v1064 = vsel %vm1000, 1, 0
        %v1065 = vsel %vm1001, 1, 0
        %v1066 = vsel %vm1002, 1, 0
        %v1067 = vsel %vm1003, 1, 0
        %v1068 = vsel %vm1004, 1, 0
        %v1069 = vsel %vm1005, 1, 0
        %v1070 = vsel %vm1006, 1, 0
        %v1071 = vsel %vm1007, 1, 0
        %v1072 = vsel %vm1008, 1, 0
        %v1073 = vsel %vm1009, 1, 0
        %v1074 = vsel %vm1010, 1, 0
        %v1075 = vsel %vm1011, 1, 0
        %v1076 = vsel %vm1012, 1, 0
        %v1077 = vsel %vm1013, 1, 0
        %v1078 = vsel %vm1014, 1, 0
        %v1079 = vsel %vm1015, 1, 0
        %v1080 = vsel %vm1016, 1, 0
        %v1081 = vsel %vm1017, 1, 0
        %v1082 = vsel %vm1018, 1, 0
        %v1083 = vsel %vm1019, 1, 0
        %v1084 = vsel %vm1020, 1, 0
        %v1085 = vsel %vm1021, 1, 0
        %v1086 = vsel %vm1022, 1, 0
        %v1087 = vsel %vm1023, 1, 0
        %v1088 = vsel %vm1024, 1, 0
        %v1089 = vsel %vm1025, 1, 0
        %v1090 = vsel %vm1026, 1, 0
        %v1091 = vsel %vm1027, 1, 0
        %v1092 = vsel %vm1028, 1, 0
        %v1093 = vsel %vm1029, 1, 0
        %v1094 = vsel %vm1030, 1, 0
        %v1095 = vsel %vm1031, 1, 0
        %v1096 = vsel %vm1032, 1, 0
        %v1097 = vsel %vm1033, 1, 0
        %v1098 = vsel %vm1034, 1, 0
        %v1099 = vsel %vm1035, 1, 0
        %v1100 = vsel %vm1036, 1, 0
        %v1101 = vsel %vm1037, 1, 0
        %v1102 = vsel %vm1038, 1, 0
        %v1103 = vsel %vm1039, 1, 0
        %v1104 = vsel %vm1040, 1, 0
        %v1105 = vsel %vm1041, 1, 0
        %v1106 = vsel %vm1042, 1, 0
        %v1107 = vsel %vm1043, 1, 0
        %v1108 = vsel %vm1044, 1, 0
        %v1109 = vsel %vm1045, 1, 0
        %v1110 = vsel %vm1046, 1, 0
        %v1111 = vsel %vm1047, 1, 0
        %v1112 = vsel %vm1048, 1, 0
        %v1113 = vsel %vm1049, 1, 0
        %v1114 = vsel %vm1050, 1, 0
        %v1115 = vsel %vm1051, 1, 0
        %v1116 = vsel %vm1052, 1, 0
        %v1117 = vsel %vm1053, 1, 0
        %v1118 = vsel %vm1054, 1, 0
        %v1119 = vcvt.s32.f32 %v1055
        %v1120 = vcvt.s32.f32 %v1056
        %v1121 = vcvt.s32.f32 %v1057
        %v1122 = vcvt.s32.f32 %v1058
        %v1123 = vcvt.s32.f32 %v1059
        %v1124 = vcvt.s32.f32 %v1060
        %v1125 = vcvt.s32.f32 %v1061
        %v1126 = vcvt.s32.f32 %v1062
        %v1127 = vcvt.s32.f32 %v1063
        %v1128 = vcvt.s32.f32 %v1064
        %v1129 = vcvt.s32.f32 %v1065
        %v1130 = vcvt.s32.f32 %v1066
        %v1131 = vcvt.s32.f32 %v1067
        %v1132 = vcvt.s32.f32 %v1068
        %v1133 = vcvt.s32.f32 %v1069
        %v1134 = vcvt.s32.f32 %v1070
        %v1135 = vcvt.s32.f32 %v1071
        %v1136 = vcvt.s32.f32 %v1072
        %v1137 = vcvt.s32.f32 %v1073
        %v1138 = vcvt.s32.f32 %v1074
        %v1139 = vcvt.s32.f32 %v1075
        %v1140 = vcvt.s32.f32 %v1076
        %v1141 = vcvt.s32.f32 %v1077
        %v1142 = vcvt.s32.f32 %v1078
        %v1143 = vcvt.s32.f32 %v1079
        %v1144 = vcvt.s32.f32 %v1080
        %v1145 = vcvt.s32.f32 %v1081
        %v1146 = vcvt.s32.f32 %v1082
        %v1147 = vcvt.s32.f32 %v1083
        %v1148 = vcvt.s32.f32 %v1084
        %v1149 = vcvt.s32.f32 %v1085
        %v1150 = vcvt.s32.f32 %v1086
        %v1151 = vcvt.s32.f32 %v1087
        %v1152 = vcvt.s32.f32 %v1088
        %v1153 = vcvt.s32.f32 %v1089
        %v1154 = vcvt.s32.f32 %v1090
        %v1155 = vcvt.s32.f32 %v1091
        %v1156 = vcvt.s32.f32 %v1092
        %v1157 = vcvt.s32.f32 %v1093
        %v1158 = vcvt.s32.f32 %v1094
        %v1159 = vcvt.s32.f32 %v1095
        %v1160 = vcvt.s32.f32 %v1096
        %v1161 = vcvt.s32.f32 %v1097
        %v1162 = vcvt.s32.f32 %v1098
        %v1163 = vcvt.s32.f32 %v1099
        %v1164 = vcvt.s32.f32 %v1100
        %v1165 = vcvt.s32.f32 %v1101
        %v1166 = vcvt.s32.f32 %v1102
        %v1167 = vcvt.s32.f32 %v1103
        %v1168 = vcvt.s32.f32 %v1104
        %v1169 = vcvt.s32.f32 %v1105
        %v1170 = vcvt.s32.f32 %v1106
        %v1171 = vcvt.s32.f32 %v1107
        %v1172 = vcvt.s32.f32 %v1108
        %v1173 = vcvt.s32.f32 %v1109
        %v1174 = vcvt.s32.f32 %v1110
        %v1175 = vcvt.s32.f32 %v1111
        %v1176 = vcvt.s32.f32 %v1112
        %v1177 = vcvt.s32.f32 %v1113
        %v1178 = vcvt.s32.f32 %v1114
        %v1179 = vcvt.s32.f32 %v1115
        %v1180 = vcvt.s32.f32 %v1116
        %v1181 = vcvt.s32.f32 %v1117
        %v1182 = vcvt.s32.f32 %v1118
        %v1183 = vpack.c.bf16 %v1121, %v1119
        %v1184 = vpack.c.bf16 %v1122, %v1120
        %v1185 = vpack.c.bf16 %v1125, %v1123
        %v1186 = vpack.c.bf16 %v1126, %v1124
        %v1187 = vpack.c.bf16 %v1129, %v1127
        %v1188 = vpack.c.bf16 %v1130, %v1128
        %v1189 = vpack.c.bf16 %v1133, %v1131
        %v1190 = vpack.c.bf16 %v1134, %v1132
        %v1191 = vpack.c.bf16 %v1137, %v1135
        %v1192 = vpack.c.bf16 %v1138, %v1136
        %v1193 = vpack.c.bf16 %v1141, %v1139
        %v1194 = vpack.c.bf16 %v1142, %v1140
        %v1195 = vpack.c.bf16 %v1145, %v1143
        %v1196 = vpack.c.bf16 %v1146, %v1144
        %v1197 = vpack.c.bf16 %v1149, %v1147
        %v1198 = vpack.c.bf16 %v1150, %v1148
        %v1199 = vpack.c.bf16 %v1153, %v1151
        %v1200 = vpack.c.bf16 %v1154, %v1152
        %v1201 = vpack.c.bf16 %v1157, %v1155
        %v1202 = vpack.c.bf16 %v1158, %v1156
        %v1203 = vpack.c.bf16 %v1161, %v1159
        %v1204 = vpack.c.bf16 %v1162, %v1160
        %v1205 = vpack.c.bf16 %v1165, %v1163
        %v1206 = vpack.c.bf16 %v1166, %v1164
        %v1207 = vpack.c.bf16 %v1169, %v1167
        %v1208 = vpack.c.bf16 %v1170, %v1168
        %v1209 = vpack.c.bf16 %v1173, %v1171
        %v1210 = vpack.c.bf16 %v1174, %v1172
        %v1211 = vpack.c.bf16 %v1177, %v1175
        %v1212 = vpack.c.bf16 %v1178, %v1176
        %v1213 = vpack.c.bf16 %v1181, %v1179
        %v1214 = vpack.c.bf16 %v1182, %v1180
        %1215 = vmatprep.subr.bf16.mxu0 %v1184
        %1216 = vmatpush1.bf16.msra.mxu0 %v1183
        %1217 = vmatprep.subr.bf16.mxu0 %v1186
        %1218 = vmatpush1.bf16.msra.mxu0 %v1185
        %1219 = vmatprep.subr.bf16.mxu0 %v1188
        %1220 = vmatpush1.bf16.msra.mxu0 %v1187
        %1221 = vmatprep.subr.bf16.mxu0 %v1190
        %1222 = vmatpush1.bf16.msra.mxu0 %v1189
        %1223 = vmatprep.subr.bf16.mxu0 %v1192
        %1224 = vmatpush1.bf16.msra.mxu0 %v1191
        %1225 = vmatprep.subr.bf16.mxu0 %v1194
        %1226 = vmatpush1.bf16.msra.mxu0 %v1193
        %1227 = vmatprep.subr.bf16.mxu0 %v1196
        %1228 = vmatpush1.bf16.msra.mxu0 %v1195
        %1229 = vmatprep.subr.bf16.mxu0 %v1198
        %1230 = vmatpush1.bf16.msra.mxu0 %v1197
        %1231 = vmatprep.subr.bf16.mxu0 %v1200
        %1232 = vmatpush1.bf16.msra.mxu0 %v1199
        %1233 = vmatprep.subr.bf16.mxu0 %v1202
        %1234 = vmatpush1.bf16.msra.mxu0 %v1201
        %1235 = vmatprep.subr.bf16.mxu0 %v1204
        %1236 = vmatpush1.bf16.msra.mxu0 %v1203
        %1237 = vmatprep.subr.bf16.mxu0 %v1206
        %1238 = vmatpush1.bf16.msra.mxu0 %v1205
        %1239 = vmatprep.subr.bf16.mxu0 %v1208
        %1240 = vmatpush1.bf16.msra.mxu0 %v1207
        %1241 = vmatprep.subr.bf16.mxu0 %v1210
        %1242 = vmatpush1.bf16.msra.mxu0 %v1209
        %1243 = vmatprep.subr.bf16.mxu0 %v1212
        %1244 = vmatpush1.bf16.msra.mxu0 %v1211
        %1245 = vmatprep.subr.bf16.mxu0 %v1214
        %1246 = vmatpush1.bf16.msra.mxu0 %v1213
        %1247 = vmatprep.mubr.bf16.mxu0 %v948
        %1248 = vmatmul.mubr.bf16.gmra.mrb[0].mxu0 %v947
        %v1249 = vpop.f32.mrb[0].mxu0
        %v1250 = vadd.f32 0.0, %v1249
        %v1251 = vpop.f32.mrb[0].mxu0
        %v1252 = vadd.f32 0.0, %v1251
        %v1253 = vpop.f32.mrb[0].mxu0
        %v1254 = vpop.f32.mrb[0].mxu0
        %1255 = vdwg.mxu0
        %1256 = vst [vmem:[#allocation2] sm:$0xff] %v1250
        %1257 = vst [vmem:[#allocation2 + $0x8] sm:$0xff] %v1252
        %v1258 = vld [vmem:[#allocation2] sm:$0xff]
        %v1259 = vld [vmem:[#allocation2 + $0x8] sm:$0xff]
        %v1260 = vld [vmem:[%s734] sm:$0xff]
        %v1261 = vld [vmem:[%s734 + $0x8] sm:$0xff]
        %v1262 = vld [vmem:[%s734 + $0x10] sm:$0xff]
        %v1263 = vld [vmem:[%s734 + $0x18] sm:$0xff]
        %v1264 = vld [vmem:[%s734 + $0x20] sm:$0xff]
        %v1265 = vld [vmem:[%s734 + $0x28] sm:$0xff]
        %v1266 = vld [vmem:[%s734 + $0x30] sm:$0xff]
        %v1267 = vld [vmem:[%s734 + $0x38] sm:$0xff]
        %v1268 = vunpack.c.l.s8.bf16 %v1260
        %v1269 = vunpack.c.l.s8.bf16 %v1261
        %v1270 = vunpack.c.h.s8.bf16 %v1260
        %v1271 = vunpack.c.h.s8.bf16 %v1261
        %v1272 = vunpack.c.l.s8.bf16 %v1262
        %v1273 = vunpack.c.l.s8.bf16 %v1263
        %v1274 = vunpack.c.h.s8.bf16 %v1262
        %v1275 = vunpack.c.h.s8.bf16 %v1263
        %v1276 = vunpack.c.l.s8.bf16 %v1264
        %v1277 = vunpack.c.l.s8.bf16 %v1265
        %v1278 = vunpack.c.h.s8.bf16 %v1264
        %v1279 = vunpack.c.h.s8.bf16 %v1265
        %v1280 = vunpack.c.l.s8.bf16 %v1266
        %v1281 = vunpack.c.l.s8.bf16 %v1267
        %v1282 = vunpack.c.h.s8.bf16 %v1266
        %v1283 = vunpack.c.h.s8.bf16 %v1267
        %v1284 = vpack.c.bf16 %v1259, %v1259
        %1285 = vmatprep.subr.bf16.mxu0 %v1269
        %1286 = vmatpush1.bf16.msra.mxu0 %v1268
        %1287 = vmatprep.subr.bf16.mxu0 %v1271
        %1288 = vmatpush1.bf16.msra.mxu0 %v1270
        %1289 = vmatprep.subr.bf16.mxu0 %v1273
        %1290 = vmatpush1.bf16.msra.mxu0 %v1272
        %1291 = vmatprep.subr.bf16.mxu0 %v1275
        %1292 = vmatpush1.bf16.msra.mxu0 %v1274
        %1293 = vmatprep.subr.bf16.mxu0 %v1277
        %1294 = vmatpush1.bf16.msra.mxu0 %v1276
        %1295 = vmatprep.subr.bf16.mxu0 %v1279
        %1296 = vmatpush1.bf16.msra.mxu0 %v1278
        %1297 = vmatprep.subr.bf16.mxu0 %v1281
        %1298 = vmatpush1.bf16.msra.mxu0 %v1280
        %1299 = vmatprep.subr.bf16.mxu0 %v1283
        %1300 = vmatpush1.bf16.msra.mxu0 %v1282
        %1301 = vmatprep.subr.bf16.mxu0 0
        %1302 = vmatpush1.bf16.msra.mxu0 0
        %1303 = vmatprep.subr.bf16.mxu0 0
        %1304 = vmatpush1.bf16.msra.mxu0 0
        %1305 = vmatprep.subr.bf16.mxu0 0
        %1306 = vmatpush1.bf16.msra.mxu0 0
        %1307 = vmatprep.subr.bf16.mxu0 0
        %1308 = vmatpush1.bf16.msra.mxu0 0
        %1309 = vmatprep.subr.bf16.mxu0 0
        %1310 = vmatpush1.bf16.msra.mxu0 0
        %1311 = vmatprep.subr.bf16.mxu0 0
        %1312 = vmatpush1.bf16.msra.mxu0 0
        %1313 = vmatprep.subr.bf16.mxu0 0
        %1314 = vmatpush1.bf16.msra.mxu0 0
        %1315 = vmatprep.subr.bf16.mxu0 0
        %1316 = vmatpush1.bf16.msra.mxu0 0
        %1317 = vmatprep.mubr.bf16.mxu0 0
        %1318 = vmatmul.mubr.bf16.gmra.mrb[0].mxu0 %v1284
        %v1319 = vpop.f32.mrb[0].mxu0
        %v1320 = vadd.f32 0.0, %v1319
        %v1321 = vpop.f32.mrb[0].mxu0
        %v1322 = vadd.f32 0.0, %v1321
        %v1323 = vpop.f32.mrb[0].mxu0
        %v1324 = vpop.f32.mrb[0].mxu0
        %1325 = vdwg.mxu0
        %v1326 = vld [vmem:[%s925] sm:$0x3]
        %v1328 = vlaneseq
        %v1329 = vshrl.u32 %v1328, 7
        %v1330 = vsub.s32 0, %v1329
        %v1331 = vrot.slane %v1326, %v1330
        %v1332 = vlaneseq
        %v1333 = vshrl.u32 %v1332, 7
        %v1334 = vsub.s32 1, %v1333
        %v1335 = vrot.slane %v1326, %v1334
        %v1338 = vmul.f32 %v1320, %v1331
        %v1339 = vmul.f32 %v1322, %v1335
        %v1340 = vld [vmem:[%s743] sm:$0x3]
        %v1342 = vlaneseq
        %v1343 = vshrl.u32 %v1342, 7
        %v1344 = vsub.s32 0, %v1343
        %v1345 = vrot.slane %v1340, %v1344
        %v1346 = vlaneseq
        %v1347 = vshrl.u32 %v1346, 7
        %v1348 = vsub.s32 1, %v1347
        %v1349 = vrot.slane %v1340, %v1348
        %v1352 = vadd.f32 %v1338, %v1345
        %v1353 = vadd.f32 %v1339, %v1349
        %v1354 = vmax.f32 %v1352, 0.0
        %v1355 = vmax.f32 %v1353, 0.0
        %v1356 = vld [vmem:[%s752] sm:$0xff]
        %v1357 = vld [vmem:[%s752 + $0x8] sm:$0xff]
        %v1358 = vld [vmem:[%s752 + $0x10] sm:$0xff]
        %v1359 = vld [vmem:[%s752 + $0x18] sm:$0xff]
        %v1360 = vld [vmem:[%s752 + $0x20] sm:$0xff]
        %v1361 = vld [vmem:[%s752 + $0x28] sm:$0xff]
        %v1362 = vld [vmem:[%s752 + $0x30] sm:$0xff]
        %v1363 = vld [vmem:[%s752 + $0x38] sm:$0xff]
        %v1364 = vld [vmem:[%s752 + $0x40] sm:$0xff]
        %v1365 = vld [vmem:[%s752 + $0x48] sm:$0xff]
        %v1366 = vld [vmem:[%s752 + $0x50] sm:$0xff]
        %v1367 = vld [vmem:[%s752 + $0x58] sm:$0xff]
        %v1368 = vld [vmem:[%s752 + $0x60] sm:$0xff]
        %v1369 = vld [vmem:[%s752 + $0x68] sm:$0xff]
        %v1370 = vld [vmem:[%s752 + $0x70] sm:$0xff]
        %v1371 = vld [vmem:[%s752 + $0x78] sm:$0xff]
        %v1372 = vunpack.c.l.s8.bf16 %v1356
        %v1373 = vunpack.c.l.s8.bf16 %v1357
        %v1374 = vunpack.c.h.s8.bf16 %v1356
        %v1375 = vunpack.c.h.s8.bf16 %v1357
        %v1376 = vunpack.c.l.s8.bf16 %v1358
        %v1377 = vunpack.c.l.s8.bf16 %v1359
        %v1378 = vunpack.c.h.s8.bf16 %v1358
        %v1379 = vunpack.c.h.s8.bf16 %v1359
        %v1380 = vunpack.c.l.s8.bf16 %v1360
        %v1381 = vunpack.c.l.s8.bf16 %v1361
        %v1382 = vunpack.c.h.s8.bf16 %v1360
        %v1383 = vunpack.c.h.s8.bf16 %v1361
        %v1384 = vunpack.c.l.s8.bf16 %v1362
        %v1385 = vunpack.c.l.s8.bf16 %v1363
        %v1386 = vunpack.c.h.s8.bf16 %v1362
        %v1387 = vunpack.c.h.s8.bf16 %v1363
        %v1388 = vunpack.c.l.s8.bf16 %v1364
        %v1389 = vunpack.c.l.s8.bf16 %v1365
        %v1390 = vunpack.c.h.s8.bf16 %v1364
        %v1391 = vunpack.c.h.s8.bf16 %v1365
        %v1392 = vunpack.c.l.s8.bf16 %v1366
        %v1393 = vunpack.c.l.s8.bf16 %v1367
        %v1394 = vunpack.c.h.s8.bf16 %v1366
        %v1395 = vunpack.c.h.s8.bf16 %v1367
        %v1396 = vunpack.c.l.s8.bf16 %v1368
        %v1397 = vunpack.c.l.s8.bf16 %v1369
        %v1398 = vunpack.c.h.s8.bf16 %v1368
        %v1399 = vunpack.c.h.s8.bf16 %v1369
        %v1400 = vunpack.c.l.s8.bf16 %v1370
        %v1401 = vunpack.c.l.s8.bf16 %v1371
        %v1402 = vunpack.c.h.s8.bf16 %v1370
        %v1403 = vunpack.c.h.s8.bf16 %v1371
        %v1404 = vpack.c.bf16 %v1354, %v1354
        %v1405 = vpack.c.bf16 %v1355, %v1355
        %1406 = vmatprep.subr.bf16.mxu0 %v1373
        %1407 = vmatpush1.bf16.msra.mxu0 %v1372
        %1408 = vmatprep.subr.bf16.mxu0 %v1375
        %1409 = vmatpush1.bf16.msra.mxu0 %v1374
        %1410 = vmatprep.subr.bf16.mxu0 %v1377
        %1411 = vmatpush1.bf16.msra.mxu0 %v1376
        %1412 = vmatprep.subr.bf16.mxu0 %v1379
        %1413 = vmatpush1.bf16.msra.mxu0 %v1378
        %1414 = vmatprep.subr.bf16.mxu0 %v1381
        %1415 = vmatpush1.bf16.msra.mxu0 %v1380
        %1416 = vmatprep.subr.bf16.mxu0 %v1383
        %1417 = vmatpush1.bf16.msra.mxu0 %v1382
        %1418 = vmatprep.subr.bf16.mxu0 %v1385
        %1419 = vmatpush1.bf16.msra.mxu0 %v1384
        %1420 = vmatprep.subr.bf16.mxu0 %v1387
        %1421 = vmatpush1.bf16.msra.mxu0 %v1386
        %1422 = vmatprep.subr.bf16.mxu0 %v1389
        %1423 = vmatpush1.bf16.msra.mxu0 %v1388
        %1424 = vmatprep.subr.bf16.mxu0 %v1391
        %1425 = vmatpush1.bf16.msra.mxu0 %v1390
        %1426 = vmatprep.subr.bf16.mxu0 %v1393
        %1427 = vmatpush1.bf16.msra.mxu0 %v1392
        %1428 = vmatprep.subr.bf16.mxu0 %v1395
        %1429 = vmatpush1.bf16.msra.mxu0 %v1394
        %1430 = vmatprep.subr.bf16.mxu0 %v1397
        %1431 = vmatpush1.bf16.msra.mxu0 %v1396
        %1432 = vmatprep.subr.bf16.mxu0 %v1399
        %1433 = vmatpush1.bf16.msra.mxu0 %v1398
        %1434 = vmatprep.subr.bf16.mxu0 %v1401
        %1435 = vmatpush1.bf16.msra.mxu0 %v1400
        %1436 = vmatprep.subr.bf16.mxu0 %v1403
        %1437 = vmatpush1.bf16.msra.mxu0 %v1402
        %1438 = vmatprep.mubr.bf16.mxu0 %v1405
        %1439 = vmatmul.mubr.bf16.gmra.mrb[0].mxu0 %v1404
        %v1440 = vpop.f32.mrb[0].mxu0
        %v1441 = vadd.f32 0.0, %v1440
        %v1442 = vpop.f32.mrb[0].mxu0
        %v1443 = vadd.f32 0.0, %v1442
        %v1444 = vpop.f32.mrb[0].mxu0
        %v1445 = vpop.f32.mrb[0].mxu0
        %1446 = vdwg.mxu0
        %v1447 = vld [vmem:[%s929] sm:$0x3]
        %v1449 = vlaneseq
        %v1450 = vshrl.u32 %v1449, 7
        %v1451 = vsub.s32 0, %v1450
        %v1452 = vrot.slane %v1447, %v1451
        %v1453 = vlaneseq
        %v1454 = vshrl.u32 %v1453, 7
        %v1455 = vsub.s32 1, %v1454
        %v1456 = vrot.slane %v1447, %v1455
        %v1459 = vmul.f32 %v1441, %v1452
        %v1460 = vmul.f32 %v1443, %v1456
        %v1461 = vld [vmem:[%s761] sm:$0x3]
        %v1463 = vlaneseq
        %v1464 = vshrl.u32 %v1463, 7
        %v1465 = vsub.s32 0, %v1464
        %v1466 = vrot.slane %v1461, %v1465
        %v1467 = vlaneseq
        %v1468 = vshrl.u32 %v1467, 7
        %v1469 = vsub.s32 1, %v1468
        %v1470 = vrot.slane %v1461, %v1469
        %v1473 = vadd.f32 %v1459, %v1466
        %v1474 = vadd.f32 %v1460, %v1470
        %v1475 = vand.u32 2147483647, %v1473
        %v1476 = vmin.f32 2.0, %v1475
        %v1477 = vmax.f32 2.0, %v1475
        %v1478 = vrcp.pop %v1477
        %v1479 = vmul.f32 %v1476, %v1478
        %v1480 = vmul.f32 %v1479, %v1479
        %v1481 = vmul.f32 0.002785687, %v1480
        %v1482 = vadd.f32 %v1481, -0.015866
        %v1483 = vmul.f32 %v1482, %v1480
        %v1484 = vadd.f32 %v1483, 0.04247222
        %v1485 = vmul.f32 %v1484, %v1480
        %v1486 = vadd.f32 %v1485, -0.074975304
        %v1487 = vmul.f32 %v1486, %v1480
        %v1488 = vadd.f32 %v1487, 0.1064488
        %v1489 = vmul.f32 %v1488, %v1480
        %v1490 = vadd.f32 %v1489, -0.14207031
        %v1491 = vmul.f32 %v1490, %v1480
        %v1492 = vadd.f32 %v1491, 0.19993454
        %v1493 = vmul.f32 %v1492, %v1480
        %v1494 = vadd.f32 %v1493, -0.33333147
        %v1495 = vmul.f32 %v1494, %v1480
        %v1496 = vmul.f32 %v1495, %v1479
        %v1497 = vadd.f32 %v1496, %v1479
        %vm1498 = vcmp.gt.f32.partialorder %v1475, 2.0
        %v1499 = vsub.f32 1.5707964, %v1497
        %v1500 = vsel %vm1498, %v1499, %v1497
        %v1501 = vsub.f32 3.1415927, %v1500
        %vm1502 = vcmp.eq.f32.partialorder %v1473, 0.0
        %v1503 = vsel %vm1502, 0.0, %v1500
        %vm1504 = vcmp.ne.f32.partialorder 2.0, 2.0
        %vm1505 = vcmp.ne.f32.partialorder %v1473, %v1473
        %vm1506 = vmor %vm1504, %vm1505
        %v1507 = vsel %vm1506, nan, %v1503
        %vm1508 = vcmp.eq.s32.totalorder %v1475, inf
        %v1509 = vand.u32 2147483647, %v1507
        %v1510 = vand.u32 %v1473, 2147483648
        %v1511 = vor.u32 %v1509, %v1510
        %v1512 = vmul.f32 %v1511, 1.272
        %v1513 = vmul.f32 %v1512, 1.442695
        %v1514 = vpow.pop %v1513
        %v1515 = vmul.f32 %v1514, %v1258
        %v1516 = vadd.f32 %v1515, %v1474
        %v1517 = vld [vmem:[%s770] sm:$0xff]
        %v1518 = vld [vmem:[%s770 + $0x8] sm:$0xff]
        %v1519 = vld [vmem:[%s770 + $0x10] sm:$0xff]
        %v1520 = vld [vmem:[%s770 + $0x18] sm:$0xff]
        %v1521 = vld [vmem:[%s770 + $0x20] sm:$0xff]
        %v1522 = vld [vmem:[%s770 + $0x28] sm:$0xff]
        %v1523 = vld [vmem:[%s770 + $0x30] sm:$0xff]
        %v1524 = vld [vmem:[%s770 + $0x38] sm:$0xff]
        %v1525 = vunpack.c.l.s8.bf16 %v1517
        %v1526 = vunpack.c.l.s8.bf16 %v1518
        %v1527 = vunpack.c.h.s8.bf16 %v1517
        %v1528 = vunpack.c.h.s8.bf16 %v1518
        %v1529 = vunpack.c.l.s8.bf16 %v1519
        %v1530 = vunpack.c.l.s8.bf16 %v1520
        %v1531 = vunpack.c.h.s8.bf16 %v1519
        %v1532 = vunpack.c.h.s8.bf16 %v1520
        %v1533 = vunpack.c.l.s8.bf16 %v1521
        %v1534 = vunpack.c.l.s8.bf16 %v1522
        %v1535 = vunpack.c.h.s8.bf16 %v1521
        %v1536 = vunpack.c.h.s8.bf16 %v1522
        %v1537 = vunpack.c.l.s8.bf16 %v1523
        %v1538 = vunpack.c.l.s8.bf16 %v1524
        %v1539 = vunpack.c.h.s8.bf16 %v1523
        %v1540 = vunpack.c.h.s8.bf16 %v1524
        %v1541 = vpack.c.bf16 %v1516, %v1516
        %1542 = vmatprep.subr.bf16.mxu0 %v1526
        %1543 = vmatpush1.bf16.msra.mxu0 %v1525
        %1544 = vmatprep.subr.bf16.mxu0 %v1528
        %1545 = vmatpush1.bf16.msra.mxu0 %v1527
        %1546 = vmatprep.subr.bf16.mxu0 %v1530
        %1547 = vmatpush1.bf16.msra.mxu0 %v1529
        %1548 = vmatprep.subr.bf16.mxu0 %v1532
        %1549 = vmatpush1.bf16.msra.mxu0 %v1531
        %1550 = vmatprep.subr.bf16.mxu0 %v1534
        %1551 = vmatpush1.bf16.msra.mxu0 %v1533
        %1552 = vmatprep.subr.bf16.mxu0 %v1536
        %1553 = vmatpush1.bf16.msra.mxu0 %v1535
        %1554 = vmatprep.subr.bf16.mxu0 %v1538
        %1555 = vmatpush1.bf16.msra.mxu0 %v1537
        %1556 = vmatprep.subr.bf16.mxu0 %v1540
        %1557 = vmatpush1.bf16.msra.mxu0 %v1539
        %1558 = vmatprep.subr.bf16.mxu0 0
        %1559 = vmatpush1.bf16.msra.mxu0 0
        %1560 = vmatprep.subr.bf16.mxu0 0
        %1561 = vmatpush1.bf16.msra.mxu0 0
        %1562 = vmatprep.subr.bf16.mxu0 0
        %1563 = vmatpush1.bf16.msra.mxu0 0
        %1564 = vmatprep.subr.bf16.mxu0 0
        %1565 = vmatpush1.bf16.msra.mxu0 0
        %1566 = vmatprep.subr.bf16.mxu0 0
        %1567 = vmatpush1.bf16.msra.mxu0 0
        %1568 = vmatprep.subr.bf16.mxu0 0
        %1569 = vmatpush1.bf16.msra.mxu0 0
        %1570 = vmatprep.subr.bf16.mxu0 0
        %1571 = vmatpush1.bf16.msra.mxu0 0
        %1572 = vmatprep.subr.bf16.mxu0 0
        %1573 = vmatpush1.bf16.msra.mxu0 0
        %1574 = vmatprep.mubr.bf16.mxu0 0
        %1575 = vmatmul.mubr.bf16.gmra.mrb[0].mxu0 %v1541
        %v1576 = vpop.f32.mrb[0].mxu0
        %v1577 = vadd.f32 0.0, %v1576
        %v1578 = vpop.f32.mrb[0].mxu0
        %v1579 = vadd.f32 0.0, %v1578
        %v1580 = vpop.f32.mrb[0].mxu0
        %v1581 = vpop.f32.mrb[0].mxu0
        %1582 = vdwg.mxu0
        %v1583 = vld [vmem:[%s779] sm:$0x3]
        %v1585 = vlaneseq
        %v1586 = vshrl.u32 %v1585, 7
        %v1587 = vsub.s32 0, %v1586
        %v1588 = vrot.slane %v1583, %v1587
        %v1589 = vlaneseq
        %v1590 = vshrl.u32 %v1589, 7
        %v1591 = vsub.s32 1, %v1590
        %v1592 = vrot.slane %v1583, %v1591
        %v1595 = vmul.f32 %v1577, %v1588
        %v1596 = vmul.f32 %v1579, %v1592
        %v1597 = vld [vmem:[%s788] sm:$0x3]
        %v1599 = vlaneseq
        %v1600 = vshrl.u32 %v1599, 7
        %v1601 = vsub.s32 0, %v1600
        %v1602 = vrot.slane %v1597, %v1601
        %v1603 = vlaneseq
        %v1604 = vshrl.u32 %v1603, 7
        %v1605 = vsub.s32 1, %v1604
        %v1606 = vrot.slane %v1597, %v1605
        %v1609 = vadd.f32 %v1595, %v1602
        %v1610 = vadd.f32 %v1596, %v1606
        %v1611 = vmax.f32 %v1609, 0.0
        %v1612 = vmax.f32 %v1610, 0.0
        %v1613 = vld [vmem:[%s797] sm:$0xff]
        %v1614 = vld [vmem:[%s797 + $0x8] sm:$0xff]
        %v1615 = vld [vmem:[%s797 + $0x10] sm:$0xff]
        %v1616 = vld [vmem:[%s797 + $0x18] sm:$0xff]
        %v1617 = vld [vmem:[%s797 + $0x20] sm:$0xff]
        %v1618 = vld [vmem:[%s797 + $0x28] sm:$0xff]
        %v1619 = vld [vmem:[%s797 + $0x30] sm:$0xff]
        %v1620 = vld [vmem:[%s797 + $0x38] sm:$0xff]
        %v1621 = vld [vmem:[%s797 + $0x40] sm:$0xff]
        %v1622 = vld [vmem:[%s797 + $0x48] sm:$0xff]
        %v1623 = vld [vmem:[%s797 + $0x50] sm:$0xff]
        %v1624 = vld [vmem:[%s797 + $0x58] sm:$0xff]
        %v1625 = vld [vmem:[%s797 + $0x60] sm:$0xff]
        %v1626 = vld [vmem:[%s797 + $0x68] sm:$0xff]
        %v1627 = vld [vmem:[%s797 + $0x70] sm:$0xff]
        %v1628 = vld [vmem:[%s797 + $0x78] sm:$0xff]
        %v1629 = vunpack.c.l.s8.bf16 %v1613
        %v1630 = vunpack.c.l.s8.bf16 %v1614
        %v1631 = vunpack.c.h.s8.bf16 %v1613
        %v1632 = vunpack.c.h.s8.bf16 %v1614
        %v1633 = vunpack.c.l.s8.bf16 %v1615
        %v1634 = vunpack.c.l.s8.bf16 %v1616
        %v1635 = vunpack.c.h.s8.bf16 %v1615
        %v1636 = vunpack.c.h.s8.bf16 %v1616
        %v1637 = vunpack.c.l.s8.bf16 %v1617
        %v1638 = vunpack.c.l.s8.bf16 %v1618
        %v1639 = vunpack.c.h.s8.bf16 %v1617
        %v1640 = vunpack.c.h.s8.bf16 %v1618
        %v1641 = vunpack.c.l.s8.bf16 %v1619
        %v1642 = vunpack.c.l.s8.bf16 %v1620
        %v1643 = vunpack.c.h.s8.bf16 %v1619
        %v1644 = vunpack.c.h.s8.bf16 %v1620
        %v1645 = vunpack.c.l.s8.bf16 %v1621
        %v1646 = vunpack.c.l.s8.bf16 %v1622
        %v1647 = vunpack.c.h.s8.bf16 %v1621
        %v1648 = vunpack.c.h.s8.bf16 %v1622
        %v1649 = vunpack.c.l.s8.bf16 %v1623
        %v1650 = vunpack.c.l.s8.bf16 %v1624
        %v1651 = vunpack.c.h.s8.bf16 %v1623
        %v1652 = vunpack.c.h.s8.bf16 %v1624
        %v1653 = vunpack.c.l.s8.bf16 %v1625
        %v1654 = vunpack.c.l.s8.bf16 %v1626
        %v1655 = vunpack.c.h.s8.bf16 %v1625
        %v1656 = vunpack.c.h.s8.bf16 %v1626
        %v1657 = vunpack.c.l.s8.bf16 %v1627
        %v1658 = vunpack.c.l.s8.bf16 %v1628
        %v1659 = vunpack.c.h.s8.bf16 %v1627
        %v1660 = vunpack.c.h.s8.bf16 %v1628
        %v1661 = vpack.c.bf16 %v1611, %v1611
        %v1662 = vpack.c.bf16 %v1612, %v1612
        %1663 = vmatprep.subr.bf16.mxu0 %v1630
        %1664 = vmatpush1.bf16.msra.mxu0 %v1629
        %1665 = vmatprep.subr.bf16.mxu0 %v1632
        %1666 = vmatpush1.bf16.msra.mxu0 %v1631
        %1667 = vmatprep.subr.bf16.mxu0 %v1634
        %1668 = vmatpush1.bf16.msra.mxu0 %v1633
        %1669 = vmatprep.subr.bf16.mxu0 %v1636
        %1670 = vmatpush1.bf16.msra.mxu0 %v1635
        %1671 = vmatprep.subr.bf16.mxu0 %v1638
        %1672 = vmatpush1.bf16.msra.mxu0 %v1637
        %1673 = vmatprep.subr.bf16.mxu0 %v1640
        %1674 = vmatpush1.bf16.msra.mxu0 %v1639
        %1675 = vmatprep.subr.bf16.mxu0 %v1642
        %1676 = vmatpush1.bf16.msra.mxu0 %v1641
        %1677 = vmatprep.subr.bf16.mxu0 %v1644
        %1678 = vmatpush1.bf16.msra.mxu0 %v1643
        %1679 = vmatprep.subr.bf16.mxu0 %v1646
        %1680 = vmatpush1.bf16.msra.mxu0 %v1645
        %1681 = vmatprep.subr.bf16.mxu0 %v1648
        %1682 = vmatpush1.bf16.msra.mxu0 %v1647
        %1683 = vmatprep.subr.bf16.mxu0 %v1650
        %1684 = vmatpush1.bf16.msra.mxu0 %v1649
        %1685 = vmatprep.subr.bf16.mxu0 %v1652
        %1686 = vmatpush1.bf16.msra.mxu0 %v1651
        %1687 = vmatprep.subr.bf16.mxu0 %v1654
        %1688 = vmatpush1.bf16.msra.mxu0 %v1653
        %1689 = vmatprep.subr.bf16.mxu0 %v1656
        %1690 = vmatpush1.bf16.msra.mxu0 %v1655
        %1691 = vmatprep.subr.bf16.mxu0 %v1658
        %1692 = vmatpush1.bf16.msra.mxu0 %v1657
        %1693 = vmatprep.subr.bf16.mxu0 %v1660
        %1694 = vmatpush1.bf16.msra.mxu0 %v1659
        %1695 = vmatprep.mubr.bf16.mxu0 %v1662
        %1696 = vmatmul.mubr.bf16.gmra.mrb[0].mxu0 %v1661
        %v1697 = vpop.f32.mrb[0].mxu0
        %v1698 = vadd.f32 0.0, %v1697
        %v1699 = vpop.f32.mrb[0].mxu0
        %v1700 = vadd.f32 0.0, %v1699
        %v1701 = vpop.f32.mrb[0].mxu0
        %v1702 = vpop.f32.mrb[0].mxu0
        %1703 = vdwg.mxu0
        %v1704 = vld [vmem:[%s806] sm:$0x3]
        %v1706 = vlaneseq
        %v1707 = vshrl.u32 %v1706, 7
        %v1708 = vsub.s32 0, %v1707
        %v1709 = vrot.slane %v1704, %v1708
        %v1710 = vlaneseq
        %v1711 = vshrl.u32 %v1710, 7
        %v1712 = vsub.s32 1, %v1711
        %v1713 = vrot.slane %v1704, %v1712
        %v1716 = vmul.f32 %v1698, %v1709
        %v1717 = vmul.f32 %v1700, %v1713
        %v1718 = vld [vmem:[%s815] sm:$0x3]
        %v1720 = vlaneseq
        %v1721 = vshrl.u32 %v1720, 7
        %v1722 = vsub.s32 0, %v1721
        %v1723 = vrot.slane %v1718, %v1722
        %v1724 = vlaneseq
        %v1725 = vshrl.u32 %v1724, 7
        %v1726 = vsub.s32 1, %v1725
        %v1727 = vrot.slane %v1718, %v1726
        %v1730 = vadd.f32 %v1716, %v1723
        %v1731 = vadd.f32 %v1717, %v1727
        %v1732 = vand.u32 2147483647, %v1730
        %v1733 = vmin.f32 2.0, %v1732
        %v1734 = vmax.f32 2.0, %v1732
        %v1735 = vrcp.pop %v1734
        %v1736 = vmul.f32 %v1733, %v1735
        %v1737 = vmul.f32 %v1736, %v1736
        %v1738 = vmul.f32 0.002785687, %v1737
        %v1739 = vadd.f32 %v1738, -0.015866
        %v1740 = vmul.f32 %v1739, %v1737
        %v1741 = vadd.f32 %v1740, 0.04247222
        %v1742 = vmul.f32 %v1741, %v1737
        %v1743 = vadd.f32 %v1742, -0.074975304
        %v1744 = vmul.f32 %v1743, %v1737
        %v1745 = vadd.f32 %v1744, 0.1064488
        %v1746 = vmul.f32 %v1745, %v1737
        %v1747 = vadd.f32 %v1746, -0.14207031
        %v1748 = vmul.f32 %v1747, %v1737
        %v1749 = vadd.f32 %v1748, 0.19993454
        %v1750 = vmul.f32 %v1749, %v1737
        %v1751 = vadd.f32 %v1750, -0.33333147
        %v1752 = vmul.f32 %v1751, %v1737
        %v1753 = vmul.f32 %v1752, %v1736
        %v1754 = vadd.f32 %v1753, %v1736
        %vm1755 = vcmp.gt.f32.partialorder %v1732, 2.0
        %v1756 = vsub.f32 1.5707964, %v1754
        %v1757 = vsel %vm1755, %v1756, %v1754
        %v1758 = vsub.f32 3.1415927, %v1757
        %vm1759 = vcmp.eq.f32.partialorder %v1730, 0.0
        %v1760 = vsel %vm1759, 0.0, %v1757
        %vm1761 = vcmp.ne.f32.partialorder 2.0, 2.0
        %vm1762 = vcmp.ne.f32.partialorder %v1730, %v1730
        %vm1763 = vmor %vm1761, %vm1762
        %v1764 = vsel %vm1763, nan, %v1760
        %vm1765 = vcmp.eq.s32.totalorder %v1732, inf
        %v1766 = vand.u32 2147483647, %v1764
        %v1767 = vand.u32 %v1730, 2147483648
        %v1768 = vor.u32 %v1766, %v1767
        %v1769 = vmul.f32 %v1768, 1.272
        %v1770 = vmul.f32 %v1769, 1.442695
        %v1771 = vpow.pop %v1770
        %v1772 = vmul.f32 %v1771, %v1259
        %v1773 = vadd.f32 %v1772, %v1731
        %1774 = vst [vmem:[#allocation21] sm:$0xff] %v1516
        %1775 = vst [vmem:[#allocation21 + $0x8] sm:$0xff] %v1773
        %v1776 = vld [vmem:[%s933] sm:$0xff]
        %1777 = vadd.xlane.f32.xlu0 %v1769
        %v1778 = vpop.xlane.xlu0 %1777
        %1779 = vadd.xlane.f32.xlu0 %v1512
        %v1780 = vpop.xlane.xlu0 %1779
        %v1781 = vadd.f32 %v1778, %v1780
        %v1782 = vadd.f32 %v1776, %v1781
        %vm1783 = vcmask 7168
        %1784 = vst.msk [vmem:[%s933] sm:$0xff] %vm1783, %v1782
        %p1785 = scmp.lt.s32.totalorder %s48, 0
        %s1786 = scalar_select %p1785, %s48, 0
        %s1787 = smul.addr %s1786, 8
        %s1788 = scalar_lea.vmem %s15, %s1787
        // Predicated region
        $region125: #{basic_module_forward.1} parent=75 // pred_check
          %p1789 = pneg %p438
        $region126: #{basic_module_forward.1} parent=75 // pred_check_branch
          %1791 = sbr.rel (%p1789) target = $region128
        $region127: #{basic_module_forward.1} parent=75 // pred_region
          %s1793 = ssub.s32 256, 256
          %1794 = vsyncadd [#allocation5], %s1793
          %s1795 = smul.addr %s48, 2
          %s1796 = smul.addr %s1795, 128
          %s1797 = scalar_lea.hbm %s14, %s1796
          %s1799 = sshll.u32 [#allocation21], 4
          %s1800 = int_to_ptr.vmem [resolvable:$true] %s1799
          %1802 = dma.vmem_to_hbm [thread:$0]  %s1800, 256, %s1797, [#allocation5]
        $region128: #{basic_module_forward.1} parent=75 // pred_fallthru
          _
        // Predicated region
        $region129: #{basic_module_forward.1} parent=75 // pred_check
          %p1803 = pneg %p464
        $region130: #{basic_module_forward.1} parent=75 // pred_check_branch
          %1805 = sbr.rel (%p1803) target = $region132
        $region131: #{basic_module_forward.1} parent=75 // pred_region
          _
        $region132: #{basic_module_forward.1} parent=75 // pred_fallthru
          _
        // Predicated region
        $region133: #{basic_module_forward.1} parent=75 // pred_check
          %p1806 = pneg %p438
        $region134: #{basic_module_forward.1} parent=75 // pred_check_branch
          %1808 = sbr.rel (%p1806) target = $region136
        $region135: #{basic_module_forward.1} parent=75 // pred_region
          %1809 = dma.done [#allocation5], 256
        $region136: #{basic_module_forward.1} parent=75 // pred_fallthru
          _
        // Predicated region
        $region137: #{basic_module_forward.1} parent=75 // pred_check
          %p1810 = pneg %p464
        $region138: #{basic_module_forward.1} parent=75 // pred_check_branch
          %1812 = sbr.rel (%p1810) target = $region140
        $region139: #{basic_module_forward.1} parent=75 // pred_region
          %p1813 = scmp.lt.s32.totalorder %s48, 0
          %s1814 = scalar_select %p1813, %s48, 0
          %s1815 = smul.addr %s1814, 8
          %s1816 = scalar_lea.vmem %s15, %s1815
        $region140: #{basic_module_forward.1} parent=75 // pred_fallthru
          _
      $region76: #{basic_module_forward.1} parent=5 // pred_fallthru
        _
      %p1817 = scmp.le.s32.totalorder 2, %s39
      // Predicated region
      $region141: #{basic_module_forward.1} parent=5 // pred_check
        %p1818 = pneg %p1817
      $region142: #{basic_module_forward.1} parent=5 // pred_check_branch
        %1820 = sbr.rel (%p1818) target = $region144
      $region143: #{basic_module_forward.1} parent=5 // pred_region
        %s1821 = ssub.s32 %s39, 2
      $region144: #{basic_module_forward.1} parent=5 // pred_fallthru
        _
    $region6: #{basic_module_forward.1} parent=1 // loop_footer
      %s43 = sadd.s32 1, %s39
    $region7: #{basic_module_forward.1} parent=1 // loop_footer_branch
      %38 = sbr.rel target = $region3
    $region8: #{basic_module_forward.1} parent=1 // loop_exit
      _
    %1822 = vsyncpa [#allocation4], 1
    %s1823 = scalar_lea.sflag [#allocation4], 1
    %1824 = vsyncpa %s1823, 1
    %1825 = vsyncpa [#allocation7], 1
    %s1826 = scalar_lea.sflag [#allocation7], 1
    %1827 = vsyncpa %s1826, 1
    %1828 = vsyncpa [#allocation10], 1
    %s1829 = scalar_lea.sflag [#allocation10], 1
    %1830 = vsyncpa %s1829, 1
    %1831 = vsyncpa [#allocation13], 1
    %s1832 = scalar_lea.sflag [#allocation13], 1
    %1833 = vsyncpa %s1832, 1
    %1834 = vsyncpa [#allocation16], 1
    %s1835 = scalar_lea.sflag [#allocation16], 1
    %1836 = vsyncpa %s1835, 1
    %1837 = vsyncpa [#allocation19], 1
    %s1838 = scalar_lea.sflag [#allocation19], 1
    %1839 = vsyncpa %s1838, 1
    %1840 = vsyncpa [#allocation5], 1
    %s1841 = scalar_lea.sflag [#allocation5], 1
    %1842 = vsyncpa %s1841, 1

</llo_original>
